<compile_context>
chip_gen: v6e
topology: v6e:2x2x1
jax: 0.10.0
libtpu: 0.0.40
codegen_flags: <defaults>
</compile_context>

<pallas_src>
import functools

import jax
import jax.numpy as jnp
from jax.experimental import pallas as pl
from jax.experimental.pallas import tpu as pltpu


def _make_kernel(H, W, Cp, TB, compute_dtype):
    """Build the per-image kernel body for static (H, W, Cp, band_rows)."""
    NB = H // TB            # number of row bands
    TBW = TB * W
    inv_n = 1.0 / float(H * W)
    eps = 1e-5

    def _x3(a):
        # ReflectionPad2d(1) along W, concatenated on the lane (channel) axis:
        #   [ x[., w-1] | x[., w] | x[., w+1] ]   (w-1 / w+1 reflected at borders)
        right = jnp.concatenate([a[:, 1:2, :], a[:, : W - 1, :]], axis=1)
        left = jnp.concatenate([a[:, 1:, :], a[:, W - 2 : W - 1, :]], axis=1)
        rows = a.shape[0]
        return jnp.concatenate([right, a, left], axis=-1).reshape(rows * W, 3 * Cp)

    def _conv_band(a_halo, w_ref):
        # a_halo: (TB+2, W, Cp) in compute_dtype; rows are this band's output
        # rows plus one reflected halo row above and below.
        x3 = _x3(a_halo)                                   # ((TB+2)*W, 3Cp)
        # Single wide matmul: columns [kh*Cp:(kh+1)*Cp] hold weight-row kh.
        p = jnp.dot(x3, w_ref[...], preferred_element_type=jnp.float32)
        # Output row h combines kh=0 from source row h-1, kh=1 from h,
        # kh=2 from h+1 -> three row-shifted slices of p (no concat copies).
        return (p[0:TBW, 0:Cp]
                + p[W:W + TBW, Cp:2 * Cp]
                + p[2 * W:2 * W + TBW, 2 * Cp:3 * Cp])     # (TB*W, Cp) float32

    def _halo_rows(ref, r0):
        # Reflected 1-row halo: row -1 -> row 1, row H -> row H-2.
        top = jnp.where(r0 == 0, 1, r0 - 1)
        bot = jnp.where(r0 + TB >= H, H - 2, r0 + TB)
        return (ref[pl.ds(top, 1), :, :],
                ref[pl.ds(r0, TB), :, :],
                ref[pl.ds(bot, 1), :, :])

    def kernel(x_ref, w1_ref, w2_ref, o_ref, buf_ref, s1_ref, s2_ref):
        # ---------- pass 1: conv1 over row bands + per-channel stats ----------
        s1_ref[...] = jnp.zeros_like(s1_ref)
        s2_ref[...] = jnp.zeros_like(s2_ref)

        def conv1_band(i, carry):
            r0 = pl.multiple_of(i * TB, TB)
            t, m, b = _halo_rows(x_ref, r0)
            a = jnp.concatenate([t, m, b], axis=0).astype(compute_dtype)
            band = _conv_band(a, w1_ref)                   # f32, bias elided
            s1_ref[...] += jnp.sum(band, axis=0, keepdims=True)
            s2_ref[...] += jnp.sum(band * band, axis=0, keepdims=True)
            buf_ref[pl.ds(r0, TB), :, :] = band.reshape(TB, W, Cp).astype(compute_dtype)
            return carry

        jax.lax.fori_loop(0, NB, conv1_band, 0)

        mean1 = s1_ref[...] * inv_n                        # (1, Cp) f32
        var1 = jnp.maximum(s2_ref[...] * inv_n - mean1 * mean1, 0.0)
        scale1 = jax.lax.rsqrt(var1 + eps)

        # ---------- pass 2: normalize+ReLU on the fly, conv2 over bands -------
        s1_ref[...] = jnp.zeros_like(s1_ref)
        s2_ref[...] = jnp.zeros_like(s2_ref)

        def conv2_band(i, carry):
            r0 = pl.multiple_of(i * TB, TB)
            t, m, b = _halo_rows(buf_ref, r0)
            a_raw = jnp.concatenate([t, m, b], axis=0).astype(jnp.float32)
            a = jnp.maximum((a_raw - mean1) * scale1, 0.0).astype(compute_dtype)
            band = _conv_band(a, w2_ref)                   # f32, bias elided
            s1_ref[...] += jnp.sum(band, axis=0, keepdims=True)
            s2_ref[...] += jnp.sum(band * band, axis=0, keepdims=True)
            # Stash raw conv2 output in the (f32) output block; normalized and
            # residual-added in pass 3 below.
            o_ref[pl.ds(r0, TB), :, :] = band.reshape(TB, W, Cp)
            return carry

        jax.lax.fori_loop(0, NB, conv2_band, 0)

        mean2 = s1_ref[...] * inv_n
        var2 = jnp.maximum(s2_ref[...] * inv_n - mean2 * mean2, 0.0)
        scale2 = jax.lax.rsqrt(var2 + eps)

        # ---------- pass 3: normalize conv2 + residual add, band by band ------
        def finalize_band(i, carry):
            r0 = pl.multiple_of(i * TB, TB)
            y = o_ref[pl.ds(r0, TB), :, :]
            o_ref[pl.ds(r0, TB), :, :] = (
                (y - mean2) * scale2 + x_ref[pl.ds(r0, TB), :, :])
            return carry

        jax.lax.fori_loop(0, NB, finalize_band, 0)

    return kernel


def _pack_weights_wide(w_oihw, c_pad, dtype):
    """(Cout, Cin, 3, 3) OIHW -> (3*Cp, 3*Cp).

    Rows are (kw, ci) to match x3's lane layout [w-1 | w | w+1]; columns are
    (kh, co) so column block kh is the weight-row-kh contribution that the
    kernel combines via row-shifted output slices.
    """
    c_out, c_in = w_oihw.shape[0], w_oihw.shape[1]
    wt = jnp.transpose(w_oihw, (3, 1, 2, 0))               # (kw, Cin, kh, Cout)
    wt = jnp.pad(wt, ((0, 0), (0, c_pad - c_in), (0, 0), (0, c_pad - c_out)))
    return wt.reshape(3 * c_pad, 3 * c_pad).astype(dtype)


def _pick_band_rows(H, W, Cp):
    """Largest divisor of H keeping per-band temporaries around <= ~2 MiB."""
    per_row = W * Cp * 26          # ~x3 + wide matmul output + halo/band buffers
    cap = max(1, (2 * 1024 * 1024) // per_row)
    tb = 1
    for d in range(1, H + 1):
        if H % d == 0 and d <= cap:
            tb = d
    return tb


def residual_block_nhwc(x_nhwc, w1_wide, w2_wide, *, band_rows=None,
                        compute_dtype=jnp.bfloat16):
    """Run the residual block on channel-padded NHWC activations.

    x_nhwc: (N, H, W, Cp) float32, Cp a multiple of 128, padded channels zero.
    w*_wide: (3*Cp, 3*Cp) from _pack_weights_wide (same compute_dtype).
    Returns (N, H, W, Cp) float32; padded channels stay exactly zero.
    """
    N, H, W, Cp = x_nhwc.shape
    assert Cp % 128 == 0 and H >= 2 and W >= 2
    TB = band_rows if band_rows is not None else _pick_band_rows(H, W, Cp)
    assert H % TB == 0, "band_rows must divide H"

    kernel = _make_kernel(H, W, Cp, TB, compute_dtype)

    # VMEM budget: double-buffered f32 in/out blocks + compute-dtype conv1
    # scratch + double-buffered weights + band temporaries + margin.
    itemsize = jnp.dtype(compute_dtype).itemsize
    img_f32 = H * W * Cp * 4
    est = (4 * img_f32                                  # x / o blocks, 2 buffers each
           + H * W * Cp * itemsize                      # conv1 scratch
           + 2 * 2 * (3 * Cp) * (3 * Cp) * itemsize     # two weights, double-buffered
           + (TB + 2) * W * Cp * 26                     # band-sized temporaries
           + (2 << 20))                                 # compiler-internal margin
    vmem_limit = int(min(max(est, 16 * 1024 * 1024), 96 * 1024 * 1024))

    return pl.pallas_call(
        kernel,
        out_shape=jax.ShapeDtypeStruct((N, H, W, Cp), jnp.float32),
        grid_spec=pltpu.PrefetchScalarGridSpec(
            num_scalar_prefetch=0,
            grid=(N,),
            in_specs=[
                pl.BlockSpec((None, H, W, Cp), lambda n: (n, 0, 0, 0)),
                pl.BlockSpec((3 * Cp, 3 * Cp), lambda n: (0, 0)),
                pl.BlockSpec((3 * Cp, 3 * Cp), lambda n: (0, 0)),
            ],
            out_specs=pl.BlockSpec((None, H, W, Cp), lambda n: (n, 0, 0, 0)),
            scratch_shapes=[
                pltpu.VMEM((H, W, Cp), compute_dtype),   # raw conv1 result
                pltpu.VMEM((1, Cp), jnp.float32),        # per-channel sum
                pltpu.VMEM((1, Cp), jnp.float32),        # per-channel sum of squares
            ],
        ),
        compiler_params=pltpu.CompilerParams(
            dimension_semantics=("parallel",),
            vmem_limit_bytes=vmem_limit,
        ),
    )(x_nhwc, w1_wide, w2_wide)


@functools.partial(jax.jit, static_argnames=("band_rows", "mxu_dtype"))
def residual_block(x_nchw, w1_oihw, b1, w2_oihw, b2, *, band_rows=None,
                   mxu_dtype=jnp.bfloat16):
    """x_nchw: (N, C, H, W) float32; weights/biases in PyTorch layout.

    b1/b2 are accepted for parity with the PyTorch module but unused: each conv
    feeds directly into an affine-free InstanceNorm, whose per-channel mean
    subtraction cancels a constant per-channel bias exactly.

    When stacking many residual blocks, prefer residual_block_nhwc() so the
    NCHW<->NHWC transposes and channel pad/slice happen once, not per block.
    """
    del b1, b2
    N, C, H, W = x_nchw.shape
    Cp = ((C + 127) // 128) * 128                          # lane-dense channel pad

    x_nhwc = jnp.transpose(x_nchw, (0, 2, 3, 1)).astype(jnp.float32)
    x_p = jnp.pad(x_nhwc, ((0, 0), (0, 0), (0, 0), (0, Cp - C)))
    w1_wide = _pack_weights_wide(w1_oihw, Cp, mxu_dtype)
    w2_wide = _pack_weights_wide(w2_oihw, Cp, mxu_dtype)

    out = residual_block_nhwc(x_p, w1_wide, w2_wide, band_rows=band_rows,
                              compute_dtype=mxu_dtype)
    out = out[..., :C]                                     # drop padded lanes
    return jnp.transpose(out, (0, 3, 1, 2)).astype(x_nchw.dtype)


def _reference(x_nchw, w1, b1, w2, b2):
    """Pure-JAX NCHW reference mirroring the PyTorch module (with biases)."""
    def refl(x):
        return jnp.pad(x, ((0, 0), (0, 0), (1, 1), (1, 1)), mode="reflect")

    def conv(x, w, b):
        y = jax.lax.conv_general_dilated(
            x, w, window_strides=(1, 1), padding="VALID",
            dimension_numbers=("NCHW", "OIHW", "NCHW"))
        return y + b[None, :, None, None]

    def inorm(x):
        m = x.mean(axis=(2, 3), keepdims=True)
        v = ((x - m) ** 2).mean(axis=(2, 3), keepdims=True)
        return (x - m) * jax.lax.rsqrt(v + 1e-5)

    y = jnp.maximum(inorm(conv(refl(x_nchw), w1, b1)), 0.0)
    y = inorm(conv(refl(y), w2, b2))
    return x_nchw + y


if __name__ == "__main__":
    N, C, H, W = 2, 4, 16, 16
    key = jax.random.PRNGKey(0)
    kx, kw1, kb1, kw2, kb2 = jax.random.split(key, 5)

    x = jax.random.normal(kx, (N, C, H, W), dtype=jnp.float32)
    # PyTorch Conv2d-shaped parameters: (C, C, 3, 3), (C,)
    fan_in = C * 3 * 3
    bound = 1.0 / (fan_in ** 0.5)
    w1 = jax.random.uniform(kw1, (C, C, 3, 3), jnp.float32, -bound, bound)
    b1 = jax.random.uniform(kb1, (C,), jnp.float32, -bound, bound)
    w2 = jax.random.uniform(kw2, (C, C, 3, 3), jnp.float32, -bound, bound)
    b2 = jax.random.uniform(kb2, (C,), jnp.float32, -bound, bound)

    ref = _reference(x, w1, b1, w2, b2)

    # Fast path: bf16 MXU operands, 4 row bands (exercises halo/reflection).
    out_fast = jax.block_until_ready(residual_block(x, w1, b1, w2, b2, band_rows=4))
    # Exact path: f32 MXU operands, 2 row bands (verifies the algorithm tightly).
    out_exact = jax.block_until_ready(
        residual_block(x, w1, b1, w2, b2, band_rows=8, mxu_dtype=jnp.float32))

    assert out_fast.shape == (N, C, H, W) and out_exact.shape == (N, C, H, W)
    # f32 path must match the f32 reference tightly.
    assert jnp.allclose(out_exact, ref, rtol=2e-4, atol=2e-4), "f32 mismatch vs reference"
    # bf16 MXU operands trade ~0.4% relative precision per conv for ~2x MXU
    # throughput (per perf review); compare with a bf16-appropriate tolerance.
    assert jnp.allclose(out_fast, ref, rtol=5e-2, atol=5e-2), "bf16 mismatch vs reference"
    assert jnp.mean(jnp.abs(out_fast - ref)) < 5e-3, "bf16 mean error too large"

    print("KERNEL_OK")
</pallas_src>

<mosaic_0001>
module attributes {stable_mosaic.version = 11 : i64} {
  func.func @kernel(%arg0: i32, %arg1: memref<1x16x16x128xf32, #tpu.memory_space<vmem>>, %arg2: memref<384x384xbf16, #tpu.memory_space<vmem>>, %arg3: memref<384x384xbf16, #tpu.memory_space<vmem>>, %arg4: memref<1x16x16x128xf32, #tpu.memory_space<vmem>>, %arg5: memref<16x16x128xbf16, #tpu.memory_space<vmem>>, %arg6: memref<1x128xf32, #tpu.memory_space<vmem>>, %arg7: memref<1x128xf32, #tpu.memory_space<vmem>>) attributes {dimension_semantics = [#tpu.dimension_semantics<parallel>], iteration_bounds = array<i64: 2>, scalar_prefetch = 0 : i64, scratch_operands = 3 : i64, tpu.core_type = #tpu.core_type<tc>, window_params = [{transform_indices = @transform_0, window_bounds = array<i64: 1, 16, 16, 128>}, {pipeline_mode = #tpu.pipeline_mode<synchronous>, transform_indices = @transform_1, window_bounds = array<i64: 384, 384>}, {pipeline_mode = #tpu.pipeline_mode<synchronous>, transform_indices = @transform_2, window_bounds = array<i64: 384, 384>}, {transform_indices = @transform_3, window_bounds = array<i64: 1, 16, 16, 128>}]} {
    %cst = arith.constant 0.000000e+00 : f32
    %0 = vector.broadcast %cst : f32 to vector<1x128xf32>
    %c0 = arith.constant 0 : index
    %c0_0 = arith.constant 0 : index
    %1 = vector.load %arg6[%c0, %c0_0] : memref<1x128xf32, #tpu.memory_space<vmem>>, vector<1x128xf32>
    tpu.vector_store %arg6[%c0, %c0_0], %0 {strides = array<i32>} : memref<1x128xf32, #tpu.memory_space<vmem>>, vector<1x128xf32>,
    %cst_1 = arith.constant 0.000000e+00 : f32
    %2 = vector.broadcast %cst_1 : f32 to vector<1x128xf32>
    %c0_2 = arith.constant 0 : index
    %c0_3 = arith.constant 0 : index
    %3 = vector.load %arg7[%c0_2, %c0_3] : memref<1x128xf32, #tpu.memory_space<vmem>>, vector<1x128xf32>
    tpu.vector_store %arg7[%c0_2, %c0_3], %2 {strides = array<i32>} : memref<1x128xf32, #tpu.memory_space<vmem>>, vector<1x128xf32>,
    %c0_i32 = arith.constant 0 : i32
    %c4_i32 = arith.constant 4 : i32
    %4 = arith.addi %c0_i32, %c4_i32 : i32
    %c1_i32 = arith.constant 1 : i32
    scf.for %arg8 = %c0_i32 to %4 step %c1_i32  : i32 {
      %c4_i32_35 = arith.constant 4 : i32
      %37 = arith.muli %arg8, %c4_i32_35 : i32
      %38 = tpu.assume_multiple %37, 4 : i32
      %c0_i32_36 = arith.constant 0 : i32
      %39 = arith.cmpi eq, %38, %c0_i32_36 : i32
      %c1_i32_37 = arith.constant 1 : i32
      %40 = arith.subi %38, %c1_i32_37 : i32
      %c1_i32_38 = arith.constant 1 : i32
      %41 = arith.select %39, %c1_i32_38, %40 : i32
      %c4_i32_39 = arith.constant 4 : i32
      %42 = arith.addi %38, %c4_i32_39 : i32
      %c16_i32 = arith.constant 16 : i32
      %43 = arith.cmpi sge, %42, %c16_i32 : i32
      %c4_i32_40 = arith.constant 4 : i32
      %44 = arith.addi %38, %c4_i32_40 : i32
      %c14_i32 = arith.constant 14 : i32
      %45 = arith.select %43, %c14_i32, %44 : i32
      %c0_41 = arith.constant 0 : index
      %46 = arith.index_cast %41 : i32 to index
      %c0_42 = arith.constant 0 : index
      %c0_43 = arith.constant 0 : index
      %47 = vector.load %arg1[%c0_41, %46, %c0_42, %c0_43] : memref<1x16x16x128xf32, #tpu.memory_space<vmem>>, vector<1x1x16x128xf32>
      %48 = vector.shape_cast %47 : vector<1x1x16x128xf32> to vector<1x16x128xf32>
      %c0_44 = arith.constant 0 : index
      %49 = arith.index_cast %38 : i32 to index
      %c0_45 = arith.constant 0 : index
      %c0_46 = arith.constant 0 : index
      %50 = vector.load %arg1[%c0_44, %49, %c0_45, %c0_46] : memref<1x16x16x128xf32, #tpu.memory_space<vmem>>, vector<1x4x16x128xf32>
      %51 = vector.shape_cast %50 : vector<1x4x16x128xf32> to vector<4x16x128xf32>
      %c0_47 = arith.constant 0 : index
      %52 = arith.index_cast %45 : i32 to index
      %c0_48 = arith.constant 0 : index
      %c0_49 = arith.constant 0 : index
      %53 = vector.load %arg1[%c0_47, %52, %c0_48, %c0_49] : memref<1x16x16x128xf32, #tpu.memory_space<vmem>>, vector<1x1x16x128xf32>
      %54 = vector.shape_cast %53 : vector<1x1x16x128xf32> to vector<1x16x128xf32>
      %55 = tpu.concatenate %48, %51, %54 in 0 : vector<1x16x128xf32>, vector<4x16x128xf32>, vector<1x16x128xf32> -> vector<6x16x128xf32>
      %56 = arith.truncf %55 : vector<6x16x128xf32> to vector<6x16x128xbf16>
      %57 = vector.extract_strided_slice %56 {offsets = [0, 1, 0], sizes = [6, 1, 128], strides = [1, 1, 1]} : vector<6x16x128xbf16> to vector<6x1x128xbf16>
      %58 = vector.extract_strided_slice %56 {offsets = [0, 0, 0], sizes = [6, 15, 128], strides = [1, 1, 1]} : vector<6x16x128xbf16> to vector<6x15x128xbf16>
      %59 = tpu.concatenate %57, %58 in 1 : vector<6x1x128xbf16>, vector<6x15x128xbf16> -> vector<6x16x128xbf16>
      %60 = vector.extract_strided_slice %56 {offsets = [0, 1, 0], sizes = [6, 15, 128], strides = [1, 1, 1]} : vector<6x16x128xbf16> to vector<6x15x128xbf16>
      %61 = vector.extract_strided_slice %56 {offsets = [0, 14, 0], sizes = [6, 1, 128], strides = [1, 1, 1]} : vector<6x16x128xbf16> to vector<6x1x128xbf16>
      %62 = tpu.concatenate %60, %61 in 1 : vector<6x15x128xbf16>, vector<6x1x128xbf16> -> vector<6x16x128xbf16>
      %63 = tpu.concatenate %59, %56, %62 in 2 : vector<6x16x128xbf16>, vector<6x16x128xbf16>, vector<6x16x128xbf16> -> vector<6x16x384xbf16>
      %64 = vector.shape_cast %63 : vector<6x16x384xbf16> to vector<96x384xbf16>
      %c0_50 = arith.constant 0 : index
      %c0_51 = arith.constant 0 : index
      %65 = vector.load %arg2[%c0_50, %c0_51] : memref<384x384xbf16, #tpu.memory_space<vmem>>, vector<384x384xbf16>
      %cst_52 = arith.constant dense<0.000000e+00> : vector<96x384xf32>
      %66 = tpu.matmul %64, %65, %cst_52 {dimension_numbers = #tpu.dot_dimension_numbers<[1], [0], [0], [1], [0, 0, 1, 1], [], []>} : vector<96x384xbf16>, vector<384x384xbf16>, vector<96x384xf32> -> vector<96x384xf32>
      %67 = vector.extract_strided_slice %66 {offsets = [0, 0], sizes = [64, 128], strides = [1, 1]} : vector<96x384xf32> to vector<64x128xf32>
      %68 = vector.extract_strided_slice %66 {offsets = [16, 128], sizes = [64, 128], strides = [1, 1]} : vector<96x384xf32> to vector<64x128xf32>
      %69 = arith.addf %67, %68 : vector<64x128xf32>
      %70 = vector.extract_strided_slice %66 {offsets = [32, 256], sizes = [64, 128], strides = [1, 1]} : vector<96x384xf32> to vector<64x128xf32>
      %71 = arith.addf %69, %70 : vector<64x128xf32>
      %c0_53 = arith.constant 0 : index
      %c0_54 = arith.constant 0 : index
      %72 = vector.load %arg6[%c0_53, %c0_54] : memref<1x128xf32, #tpu.memory_space<vmem>>, vector<1x128xf32>
      %cst_55 = arith.constant dense<0.000000e+00> : vector<128xf32>
      %73 = vector.multi_reduction <add>, %71, %cst_55 [0] : vector<64x128xf32> to vector<128xf32>
      %74 = vector.shape_cast %73 : vector<128xf32> to vector<1x128xf32>
      %75 = arith.addf %72, %74 : vector<1x128xf32>
      %c0_56 = arith.constant 0 : index
      %c0_57 = arith.constant 0 : index
      %76 = vector.load %arg6[%c0_56, %c0_57] : memref<1x128xf32, #tpu.memory_space<vmem>>, vector<1x128xf32>
      tpu.vector_store %arg6[%c0_56, %c0_57], %75 {strides = array<i32>} : memref<1x128xf32, #tpu.memory_space<vmem>>, vector<1x128xf32>,
      %c0_58 = arith.constant 0 : index
      %c0_59 = arith.constant 0 : index
      %77 = vector.load %arg7[%c0_58, %c0_59] : memref<1x128xf32, #tpu.memory_space<vmem>>, vector<1x128xf32>
      %78 = arith.mulf %71, %71 : vector<64x128xf32>
      %cst_60 = arith.constant dense<0.000000e+00> : vector<128xf32>
      %79 = vector.multi_reduction <add>, %78, %cst_60 [0] : vector<64x128xf32> to vector<128xf32>
      %80 = vector.shape_cast %79 : vector<128xf32> to vector<1x128xf32>
      %81 = arith.addf %77, %80 : vector<1x128xf32>
      %c0_61 = arith.constant 0 : index
      %c0_62 = arith.constant 0 : index
      %82 = vector.load %arg7[%c0_61, %c0_62] : memref<1x128xf32, #tpu.memory_space<vmem>>, vector<1x128xf32>
      tpu.vector_store %arg7[%c0_61, %c0_62], %81 {strides = array<i32>} : memref<1x128xf32, #tpu.memory_space<vmem>>, vector<1x128xf32>,
      %83 = vector.shape_cast %71 : vector<64x128xf32> to vector<4x16x128xf32>
      %84 = arith.truncf %83 : vector<4x16x128xf32> to vector<4x16x128xbf16>
      %85 = arith.index_cast %38 : i32 to index
      %c0_63 = arith.constant 0 : index
      %c0_64 = arith.constant 0 : index
      %86 = vector.load %arg5[%85, %c0_63, %c0_64] : memref<16x16x128xbf16, #tpu.memory_space<vmem>>, vector<4x16x128xbf16>
      tpu.vector_store %arg5[%85, %c0_63, %c0_64], %84 {strides = array<i32>} : memref<16x16x128xbf16, #tpu.memory_space<vmem>>, vector<4x16x128xbf16>,
    }
    %c4_i32_4 = arith.constant 4 : i32
    %c0_5 = arith.constant 0 : index
    %c0_6 = arith.constant 0 : index
    %5 = vector.load %arg6[%c0_5, %c0_6] : memref<1x128xf32, #tpu.memory_space<vmem>>, vector<1x128xf32>
    %cst_7 = arith.constant 3.906250e-03 : f32
    %6 = vector.broadcast %cst_7 : f32 to vector<1x128xf32>
    %7 = arith.mulf %5, %6 : vector<1x128xf32>
    %c0_8 = arith.constant 0 : index
    %c0_9 = arith.constant 0 : index
    %8 = vector.load %arg7[%c0_8, %c0_9] : memref<1x128xf32, #tpu.memory_space<vmem>>, vector<1x128xf32>
    %cst_10 = arith.constant 3.906250e-03 : f32
    %9 = vector.broadcast %cst_10 : f32 to vector<1x128xf32>
    %10 = arith.mulf %8, %9 : vector<1x128xf32>
    %11 = arith.mulf %7, %7 : vector<1x128xf32>
    %12 = arith.subf %10, %11 : vector<1x128xf32>
    %cst_11 = arith.constant 0.000000e+00 : f32
    %13 = vector.broadcast %cst_11 : f32 to vector<1x128xf32>
    %14 = arith.maximumf %12, %13 : vector<1x128xf32>
    %cst_12 = arith.constant 9.99999974E-6 : f32
    %15 = vector.broadcast %cst_12 : f32 to vector<1x128xf32>
    %16 = arith.addf %14, %15 : vector<1x128xf32>
    %17 = math.rsqrt %16 : vector<1x128xf32>
    %cst_13 = arith.constant 0.000000e+00 : f32
    %18 = vector.broadcast %cst_13 : f32 to vector<1x128xf32>
    %c0_14 = arith.constant 0 : index
    %c0_15 = arith.constant 0 : index
    %19 = vector.load %arg6[%c0_14, %c0_15] : memref<1x128xf32, #tpu.memory_space<vmem>>, vector<1x128xf32>
    tpu.vector_store %arg6[%c0_14, %c0_15], %18 {strides = array<i32>} : memref<1x128xf32, #tpu.memory_space<vmem>>, vector<1x128xf32>,
    %cst_16 = arith.constant 0.000000e+00 : f32
    %20 = vector.broadcast %cst_16 : f32 to vector<1x128xf32>
    %c0_17 = arith.constant 0 : index
    %c0_18 = arith.constant 0 : index
    %21 = vector.load %arg7[%c0_17, %c0_18] : memref<1x128xf32, #tpu.memory_space<vmem>>, vector<1x128xf32>
    tpu.vector_store %arg7[%c0_17, %c0_18], %20 {strides = array<i32>} : memref<1x128xf32, #tpu.memory_space<vmem>>, vector<1x128xf32>,
    %c0_i32_19 = arith.constant 0 : i32
    %c4_i32_20 = arith.constant 4 : i32
    %22 = arith.addi %c0_i32_19, %c4_i32_20 : i32
    %c1_i32_21 = arith.constant 1 : i32
    scf.for %arg8 = %c0_i32_19 to %22 step %c1_i32_21  : i32 {
      %c4_i32_35 = arith.constant 4 : i32
      %37 = arith.muli %arg8, %c4_i32_35 : i32
      %38 = tpu.assume_multiple %37, 4 : i32
      %c0_i32_36 = arith.constant 0 : i32
      %39 = arith.cmpi eq, %38, %c0_i32_36 : i32
      %c1_i32_37 = arith.constant 1 : i32
      %40 = arith.subi %38, %c1_i32_37 : i32
      %c1_i32_38 = arith.constant 1 : i32
      %41 = arith.select %39, %c1_i32_38, %40 : i32
      %c4_i32_39 = arith.constant 4 : i32
      %42 = arith.addi %38, %c4_i32_39 : i32
      %c16_i32 = arith.constant 16 : i32
      %43 = arith.cmpi sge, %42, %c16_i32 : i32
      %c4_i32_40 = arith.constant 4 : i32
      %44 = arith.addi %38, %c4_i32_40 : i32
      %c14_i32 = arith.constant 14 : i32
      %45 = arith.select %43, %c14_i32, %44 : i32
      %46 = arith.index_cast %41 : i32 to index
      %c0_41 = arith.constant 0 : index
      %c0_42 = arith.constant 0 : index
      %47 = vector.load %arg5[%46, %c0_41, %c0_42] : memref<16x16x128xbf16, #tpu.memory_space<vmem>>, vector<1x16x128xbf16>
      %48 = arith.index_cast %38 : i32 to index
      %c0_43 = arith.constant 0 : index
      %c0_44 = arith.constant 0 : index
      %49 = vector.load %arg5[%48, %c0_43, %c0_44] : memref<16x16x128xbf16, #tpu.memory_space<vmem>>, vector<4x16x128xbf16>
      %50 = arith.index_cast %45 : i32 to index
      %c0_45 = arith.constant 0 : index
      %c0_46 = arith.constant 0 : index
      %51 = vector.load %arg5[%50, %c0_45, %c0_46] : memref<16x16x128xbf16, #tpu.memory_space<vmem>>, vector<1x16x128xbf16>
      %52 = tpu.concatenate %47, %49, %51 in 0 : vector<1x16x128xbf16>, vector<4x16x128xbf16>, vector<1x16x128xbf16> -> vector<6x16x128xbf16>
      %53 = arith.extf %52 : vector<6x16x128xbf16> to vector<6x16x128xf32>
      %54 = vector.shape_cast %7 : vector<1x128xf32> to vector<1x1x128xf32>
      %55 = vector.broadcast %54 : vector<1x1x128xf32> to vector<6x16x128xf32>
      %56 = arith.subf %53, %55 : vector<6x16x128xf32>
      %57 = vector.shape_cast %17 : vector<1x128xf32> to vector<1x1x128xf32>
      %58 = vector.broadcast %57 : vector<1x1x128xf32> to vector<6x16x128xf32>
      %59 = arith.mulf %56, %58 : vector<6x16x128xf32>
      %cst_47 = arith.constant 0.000000e+00 : f32
      %60 = vector.broadcast %cst_47 : f32 to vector<6x16x128xf32>
      %61 = arith.maximumf %59, %60 : vector<6x16x128xf32>
      %62 = arith.truncf %61 : vector<6x16x128xf32> to vector<6x16x128xbf16>
      %63 = vector.extract_strided_slice %62 {offsets = [0, 1, 0], sizes = [6, 1, 128], strides = [1, 1, 1]} : vector<6x16x128xbf16> to vector<6x1x128xbf16>
      %64 = vector.extract_strided_slice %62 {offsets = [0, 0, 0], sizes = [6, 15, 128], strides = [1, 1, 1]} : vector<6x16x128xbf16> to vector<6x15x128xbf16>
      %65 = tpu.concatenate %63, %64 in 1 : vector<6x1x128xbf16>, vector<6x15x128xbf16> -> vector<6x16x128xbf16>
      %66 = vector.extract_strided_slice %62 {offsets = [0, 1, 0], sizes = [6, 15, 128], strides = [1, 1, 1]} : vector<6x16x128xbf16> to vector<6x15x128xbf16>
      %67 = vector.extract_strided_slice %62 {offsets = [0, 14, 0], sizes = [6, 1, 128], strides = [1, 1, 1]} : vector<6x16x128xbf16> to vector<6x1x128xbf16>
      %68 = tpu.concatenate %66, %67 in 1 : vector<6x15x128xbf16>, vector<6x1x128xbf16> -> vector<6x16x128xbf16>
      %69 = tpu.concatenate %65, %62, %68 in 2 : vector<6x16x128xbf16>, vector<6x16x128xbf16>, vector<6x16x128xbf16> -> vector<6x16x384xbf16>
      %70 = vector.shape_cast %69 : vector<6x16x384xbf16> to vector<96x384xbf16>
      %c0_48 = arith.constant 0 : index
      %c0_49 = arith.constant 0 : index
      %71 = vector.load %arg3[%c0_48, %c0_49] : memref<384x384xbf16, #tpu.memory_space<vmem>>, vector<384x384xbf16>
      %cst_50 = arith.constant dense<0.000000e+00> : vector<96x384xf32>
      %72 = tpu.matmul %70, %71, %cst_50 {dimension_numbers = #tpu.dot_dimension_numbers<[1], [0], [0], [1], [0, 0, 1, 1], [], []>} : vector<96x384xbf16>, vector<384x384xbf16>, vector<96x384xf32> -> vector<96x384xf32>
      %73 = vector.extract_strided_slice %72 {offsets = [0, 0], sizes = [64, 128], strides = [1, 1]} : vector<96x384xf32> to vector<64x128xf32>
      %74 = vector.extract_strided_slice %72 {offsets = [16, 128], sizes = [64, 128], strides = [1, 1]} : vector<96x384xf32> to vector<64x128xf32>
      %75 = arith.addf %73, %74 : vector<64x128xf32>
      %76 = vector.extract_strided_slice %72 {offsets = [32, 256], sizes = [64, 128], strides = [1, 1]} : vector<96x384xf32> to vector<64x128xf32>
      %77 = arith.addf %75, %76 : vector<64x128xf32>
      %c0_51 = arith.constant 0 : index
      %c0_52 = arith.constant 0 : index
      %78 = vector.load %arg6[%c0_51, %c0_52] : memref<1x128xf32, #tpu.memory_space<vmem>>, vector<1x128xf32>
      %cst_53 = arith.constant dense<0.000000e+00> : vector<128xf32>
      %79 = vector.multi_reduction <add>, %77, %cst_53 [0] : vector<64x128xf32> to vector<128xf32>
      %80 = vector.shape_cast %79 : vector<128xf32> to vector<1x128xf32>
      %81 = arith.addf %78, %80 : vector<1x128xf32>
      %c0_54 = arith.constant 0 : index
      %c0_55 = arith.constant 0 : index
      %82 = vector.load %arg6[%c0_54, %c0_55] : memref<1x128xf32, #tpu.memory_space<vmem>>, vector<1x128xf32>
      tpu.vector_store %arg6[%c0_54, %c0_55], %81 {strides = array<i32>} : memref<1x128xf32, #tpu.memory_space<vmem>>, vector<1x128xf32>,
      %c0_56 = arith.constant 0 : index
      %c0_57 = arith.constant 0 : index
      %83 = vector.load %arg7[%c0_56, %c0_57] : memref<1x128xf32, #tpu.memory_space<vmem>>, vector<1x128xf32>
      %84 = arith.mulf %77, %77 : vector<64x128xf32>
      %cst_58 = arith.constant dense<0.000000e+00> : vector<128xf32>
      %85 = vector.multi_reduction <add>, %84, %cst_58 [0] : vector<64x128xf32> to vector<128xf32>
      %86 = vector.shape_cast %85 : vector<128xf32> to vector<1x128xf32>
      %87 = arith.addf %83, %86 : vector<1x128xf32>
      %c0_59 = arith.constant 0 : index
      %c0_60 = arith.constant 0 : index
      %88 = vector.load %arg7[%c0_59, %c0_60] : memref<1x128xf32, #tpu.memory_space<vmem>>, vector<1x128xf32>
      tpu.vector_store %arg7[%c0_59, %c0_60], %87 {strides = array<i32>} : memref<1x128xf32, #tpu.memory_space<vmem>>, vector<1x128xf32>,
      %89 = vector.shape_cast %77 : vector<64x128xf32> to vector<4x16x128xf32>
      %c0_61 = arith.constant 0 : index
      %90 = arith.index_cast %38 : i32 to index
      %c0_62 = arith.constant 0 : index
      %c0_63 = arith.constant 0 : index
      %91 = vector.load %arg4[%c0_61, %90, %c0_62, %c0_63] : memref<1x16x16x128xf32, #tpu.memory_space<vmem>>, vector<1x4x16x128xf32>
      %92 = vector.shape_cast %91 : vector<1x4x16x128xf32> to vector<4x16x128xf32>
      %93 = vector.shape_cast %89 : vector<4x16x128xf32> to vector<1x4x16x128xf32>
      tpu.vector_store %arg4[%c0_61, %90, %c0_62, %c0_63], %93 {strides = array<i32>} : memref<1x16x16x128xf32, #tpu.memory_space<vmem>>, vector<1x4x16x128xf32>,
    }
    %c4_i32_22 = arith.constant 4 : i32
    %c0_23 = arith.constant 0 : index
    %c0_24 = arith.constant 0 : index
    %23 = vector.load %arg6[%c0_23, %c0_24] : memref<1x128xf32, #tpu.memory_space<vmem>>, vector<1x128xf32>
    %cst_25 = arith.constant 3.906250e-03 : f32
    %24 = vector.broadcast %cst_25 : f32 to vector<1x128xf32>
    %25 = arith.mulf %23, %24 : vector<1x128xf32>
    %c0_26 = arith.constant 0 : index
    %c0_27 = arith.constant 0 : index
    %26 = vector.load %arg7[%c0_26, %c0_27] : memref<1x128xf32, #tpu.memory_space<vmem>>, vector<1x128xf32>
    %cst_28 = arith.constant 3.906250e-03 : f32
    %27 = vector.broadcast %cst_28 : f32 to vector<1x128xf32>
    %28 = arith.mulf %26, %27 : vector<1x128xf32>
    %29 = arith.mulf %25, %25 : vector<1x128xf32>
    %30 = arith.subf %28, %29 : vector<1x128xf32>
    %cst_29 = arith.constant 0.000000e+00 : f32
    %31 = vector.broadcast %cst_29 : f32 to vector<1x128xf32>
    %32 = arith.maximumf %30, %31 : vector<1x128xf32>
    %cst_30 = arith.constant 9.99999974E-6 : f32
    %33 = vector.broadcast %cst_30 : f32 to vector<1x128xf32>
    %34 = arith.addf %32, %33 : vector<1x128xf32>
    %35 = math.rsqrt %34 : vector<1x128xf32>
    %c0_i32_31 = arith.constant 0 : i32
    %c4_i32_32 = arith.constant 4 : i32
    %36 = arith.addi %c0_i32_31, %c4_i32_32 : i32
    %c1_i32_33 = arith.constant 1 : i32
    scf.for %arg8 = %c0_i32_31 to %36 step %c1_i32_33  : i32 {
      %c4_i32_35 = arith.constant 4 : i32
      %37 = arith.muli %arg8, %c4_i32_35 : i32
      %38 = tpu.assume_multiple %37, 4 : i32
      %c0_36 = arith.constant 0 : index
      %39 = arith.index_cast %38 : i32 to index
      %c0_37 = arith.constant 0 : index
      %c0_38 = arith.constant 0 : index
      %40 = vector.load %arg4[%c0_36, %39, %c0_37, %c0_38] : memref<1x16x16x128xf32, #tpu.memory_space<vmem>>, vector<1x4x16x128xf32>
      %41 = vector.shape_cast %40 : vector<1x4x16x128xf32> to vector<4x16x128xf32>
      %42 = vector.shape_cast %25 : vector<1x128xf32> to vector<1x1x128xf32>
      %43 = vector.broadcast %42 : vector<1x1x128xf32> to vector<4x16x128xf32>
      %44 = arith.subf %41, %43 : vector<4x16x128xf32>
      %45 = vector.shape_cast %35 : vector<1x128xf32> to vector<1x1x128xf32>
      %46 = vector.broadcast %45 : vector<1x1x128xf32> to vector<4x16x128xf32>
      %47 = arith.mulf %44, %46 : vector<4x16x128xf32>
      %c0_39 = arith.constant 0 : index
      %48 = arith.index_cast %38 : i32 to index
      %c0_40 = arith.constant 0 : index
      %c0_41 = arith.constant 0 : index
      %49 = vector.load %arg1[%c0_39, %48, %c0_40, %c0_41] : memref<1x16x16x128xf32, #tpu.memory_space<vmem>>, vector<1x4x16x128xf32>
      %50 = vector.shape_cast %49 : vector<1x4x16x128xf32> to vector<4x16x128xf32>
      %51 = arith.addf %47, %50 : vector<4x16x128xf32>
      %c0_42 = arith.constant 0 : index
      %52 = arith.index_cast %38 : i32 to index
      %c0_43 = arith.constant 0 : index
      %c0_44 = arith.constant 0 : index
      %53 = vector.load %arg4[%c0_42, %52, %c0_43, %c0_44] : memref<1x16x16x128xf32, #tpu.memory_space<vmem>>, vector<1x4x16x128xf32>
      %54 = vector.shape_cast %53 : vector<1x4x16x128xf32> to vector<4x16x128xf32>
      %55 = vector.shape_cast %51 : vector<4x16x128xf32> to vector<1x4x16x128xf32>
      tpu.vector_store %arg4[%c0_42, %52, %c0_43, %c0_44], %55 {strides = array<i32>} : memref<1x16x16x128xf32, #tpu.memory_space<vmem>>, vector<1x4x16x128xf32>,
    }
    %c4_i32_34 = arith.constant 4 : i32
    return
  }
  func.func @transform_0(%arg0: i32) -> (i32, i32, i32, i32) {
    %c0_i32 = arith.constant 0 : i32
    %c0_i32_0 = arith.constant 0 : i32
    %c0_i32_1 = arith.constant 0 : i32
    %c0_i32_2 = arith.constant 0 : i32
    return %arg0, %c0_i32, %c0_i32_0, %c0_i32_1 : i32, i32, i32, i32
  }
  func.func @transform_1(%arg0: i32) -> (i32, i32) {
    %c0_i32 = arith.constant 0 : i32
    %c0_i32_0 = arith.constant 0 : i32
    %c0_i32_1 = arith.constant 0 : i32
    return %c0_i32, %c0_i32_0 : i32, i32
  }
  func.func @transform_2(%arg0: i32) -> (i32, i32) {
    %c0_i32 = arith.constant 0 : i32
    %c0_i32_0 = arith.constant 0 : i32
    %c0_i32_1 = arith.constant 0 : i32
    return %c0_i32, %c0_i32_0 : i32, i32
  }
  func.func @transform_3(%arg0: i32) -> (i32, i32, i32, i32) {
    %c0_i32 = arith.constant 0 : i32
    %c0_i32_0 = arith.constant 0 : i32
    %c0_i32_1 = arith.constant 0 : i32
    %c0_i32_2 = arith.constant 0 : i32
    return %arg0, %c0_i32, %c0_i32_0, %c0_i32_1 : i32, i32, i32, i32
  }
}

</mosaic_0001>

<llo_original>
// kernel: residual_block.1
$region0: #{residual_block.1}
  #allocation0 [shape = 'u32[]', space=smem, size = 0x4, offset = 0x4, fixed_abs, tag = 'smem constant byte address 0x4 - core index']
  #allocation1 [shape = 'u32[144,128]{1,0:T(1,128)}', space=vmem, size = 0x12000, scoped, tag = 'internal scratch']
  #allocation2 [shape = 'bf16[16,16,128]{2,1,0:T(8,128)(2,1)}', space=vmem, size = 0x10000, scoped, tag = 'scratch operand']
  #allocation3 [shape = 'f32[1,128]{1,0:T(1,128)}', space=vmem, size = 0x200, scoped, tag = 'scratch operand']
  #allocation4 [shape = 'f32[1,128]{1,0:T(1,128)}', space=vmem, size = 0x200, scoped, tag = 'scratch operand']
  %s0 = inlined_call_operand.vmem [shape: f32[2,16,16,128], index: 0, kind: input, shape index: {}]
  %s1 = inlined_call_operand.vmem [shape: bf16[384,384], index: 1, kind: input, shape index: {}]
  %s2 = inlined_call_operand.vmem [shape: bf16[384,384], index: 2, kind: input, shape index: {}]
  %s3 = inlined_call_operand.vmem [shape: f32[2,16,16,128], index: 3, kind: output, shape index: {}]
  %s4 = sld [smem:[#allocation0]]
  $region66: #{residual_block.1} parent=0
    _
  %s6 = ssub.s32 1, %s4
  %s7 = scalar_select 0, %s6, %s4
  loop: start=0, step=1, limit=4
  $region2: #{residual_block.1} parent=0 // loop_pre_header
    _
  $region3: #{residual_block.1} parent=0 // loop_header
    %s9 = sphi 0, %s13
    %p10 = scmp.ge.s32.totalorder %s9, 4
    %s19 = sphi 0, %s21
    %s22 = sphi 0, %s19
    %s23 = sphi 0, %s22
    %s39 = sphi 0, %s23
    %s43 = sphi 0, %s43
    %s45 = sphi 0, %s43
    %s46 = sphi 0, %s45
    %s60 = sphi 0, %s46
    %s64 = sphi 0, %s64
    %s66 = sphi 0, %s64
    %s67 = sphi 0, %s66
    %s81 = sphi 0, %s67
    %s87 = sphi 0, %s89
    %s90 = sphi 0, %s87
    %s91 = sphi 0, %s90
    %s107 = sphi 0, %s91
  $region4: #{residual_block.1} parent=0 // loop_header_branch
    %12 = sbr.rel (%p10) target = $region8
  $region5: #{residual_block.1} parent=0 // loop_body
    %s14 = ssub.s32 %s9, 1
    %s15 = ssub.s32 %s9, 2
    %s16 = sadd.s32 %s9, 1
    %s17 = ssub.s32 %s9, %s16
    %p18 = scmp.eq.s32.totalorder %s17, 0
    %s20 = sadd.s32 %s19, 1
    %s21 = scalar_select %p18, %s19, %s20
    %p24 = pneg %p18
    %p25 = scmp.eq.s32.totalorder %s9, 1
    %p26 = por %p24, %p25
    %p27 = scmp.ne.s32.totalorder %s19, %s22
    %p28 = scmp.eq.s32.totalorder %s9, 0
    %p29 = por %p27, %p28
    %p30 = scmp.ne.s32.totalorder %s19, %s22
    %p31 = scmp.eq.s32.totalorder %s14, 1
    %p32 = por %p30, %p31
    %p33 = scmp.ne.s32.totalorder %s22, %s23
    %p34 = scmp.eq.s32.totalorder %s14, 0
    %p35 = por %p33, %p34
    %p36 = scmp.ne.s32.totalorder %s22, %s23
    %p37 = scmp.eq.s32.totalorder %s15, 1
    %p38 = por %p36, %p37
    %p40 = scmp.ne.s32.totalorder %s23, %s39
    %p41 = scmp.eq.s32.totalorder %s15, 0
    %p42 = por %p40, %p41
    %s44 = sadd.s32 %s43, 1
    %p47 = scmp.eq.s32.totalorder %s9, 1
    %p48 = scmp.ne.s32.totalorder %s43, %s45
    %p49 = scmp.eq.s32.totalorder %s9, 0
    %p50 = por %p48, %p49
    %p51 = scmp.ne.s32.totalorder %s43, %s45
    %p52 = scmp.eq.s32.totalorder %s14, 1
    %p53 = por %p51, %p52
    %p54 = scmp.ne.s32.totalorder %s45, %s46
    %p55 = scmp.eq.s32.totalorder %s14, 0
    %p56 = por %p54, %p55
    %p57 = scmp.ne.s32.totalorder %s45, %s46
    %p58 = scmp.eq.s32.totalorder %s15, 1
    %p59 = por %p57, %p58
    %p61 = scmp.ne.s32.totalorder %s46, %s60
    %p62 = scmp.eq.s32.totalorder %s15, 0
    %p63 = por %p61, %p62
    %s65 = sadd.s32 %s64, 1
    %p68 = scmp.eq.s32.totalorder %s9, 1
    %p69 = scmp.ne.s32.totalorder %s64, %s66
    %p70 = scmp.eq.s32.totalorder %s9, 0
    %p71 = por %p69, %p70
    %p72 = scmp.ne.s32.totalorder %s64, %s66
    %p73 = scmp.eq.s32.totalorder %s14, 1
    %p74 = por %p72, %p73
    %p75 = scmp.ne.s32.totalorder %s66, %s67
    %p76 = scmp.eq.s32.totalorder %s14, 0
    %p77 = por %p75, %p76
    %p78 = scmp.ne.s32.totalorder %s66, %s67
    %p79 = scmp.eq.s32.totalorder %s15, 1
    %p80 = por %p78, %p79
    %p82 = scmp.ne.s32.totalorder %s67, %s81
    %p83 = scmp.eq.s32.totalorder %s15, 0
    %p84 = por %p82, %p83
    %s85 = ssub.s32 %s9, %s16
    %p86 = scmp.eq.s32.totalorder %s85, 0
    %s88 = sadd.s32 %s87, 1
    %s89 = scalar_select %p86, %s87, %s88
    %p92 = pneg %p86
    %p93 = scmp.eq.s32.totalorder %s9, 1
    %p94 = por %p92, %p93
    %p95 = scmp.ne.s32.totalorder %s87, %s90
    %p96 = scmp.eq.s32.totalorder %s9, 0
    %p97 = por %p95, %p96
    %p98 = scmp.ne.s32.totalorder %s87, %s90
    %p99 = scmp.eq.s32.totalorder %s14, 1
    %p100 = por %p98, %p99
    %p101 = scmp.ne.s32.totalorder %s90, %s91
    %p102 = scmp.eq.s32.totalorder %s14, 0
    %p103 = por %p101, %p102
    %p104 = scmp.ne.s32.totalorder %s90, %s91
    %p105 = scmp.eq.s32.totalorder %s15, 1
    %p106 = por %p104, %p105
    %p108 = scmp.ne.s32.totalorder %s91, %s107
    %p109 = scmp.eq.s32.totalorder %s15, 0
    %p110 = por %p108, %p109
    %p111 = scmp.le.s32.totalorder 1, %s9
    %p112 = scmp.lt.s32.totalorder %s9, 3
    %p113 = pnand %p111, %p112
    %p114 = pneg %p113
    // Predicated region
    $region9: #{residual_block.1} parent=5 // pred_check
      _
    $region10: #{residual_block.1} parent=5 // pred_check_branch
      %116 = sbr.rel (%p113) target = $region12
    $region11: #{residual_block.1} parent=5 // pred_region
      %s117 = ssub.s32 %s9, 1
      // Predicated region
      $region13: #{residual_block.1} parent=11 // pred_check
        %p118 = pneg %p56
      $region14: #{residual_block.1} parent=11 // pred_check_branch
        %120 = sbr.rel (%p118) target = $region16
      $region15: #{residual_block.1} parent=11 // pred_region
        _
      $region16: #{residual_block.1} parent=11 // pred_fallthru
        _
      // Predicated region
      $region17: #{residual_block.1} parent=11 // pred_check
        %p121 = pneg %p77
      $region18: #{residual_block.1} parent=11 // pred_check_branch
        %123 = sbr.rel (%p121) target = $region20
      $region19: #{residual_block.1} parent=11 // pred_region
        _
      $region20: #{residual_block.1} parent=11 // pred_fallthru
        _
    $region12: #{residual_block.1} parent=5 // pred_fallthru
      _
    %p124 = scmp.lt.s32.totalorder %s9, 2
    // Predicated region
    $region21: #{residual_block.1} parent=5 // pred_check
      %p125 = pneg %p124
    $region22: #{residual_block.1} parent=5 // pred_check_branch
      %127 = sbr.rel (%p125) target = $region24
    $region23: #{residual_block.1} parent=5 // pred_region
      // Predicated region
      $region25: #{residual_block.1} parent=23 // pred_check
        %p128 = pneg %p29
      $region26: #{residual_block.1} parent=23 // pred_check_branch
        %130 = sbr.rel (%p128) target = $region28
      $region27: #{residual_block.1} parent=23 // pred_region
        %p131 = scmp.lt.s32.totalorder %s9, 1
        %s132 = scalar_select %p131, %s9, 1
        %s133 = smul.addr %s132, 32
        %s134 = smul.addr %s133, 8
        %s135 = scalar_lea.vmem %s0, %s134
      $region28: #{residual_block.1} parent=23 // pred_fallthru
        _
    $region24: #{residual_block.1} parent=5 // pred_fallthru
      _
    %p136 = scmp.le.s32.totalorder 1, %s9
    %p137 = scmp.lt.s32.totalorder %s9, 3
    %p138 = pnand %p136, %p137
    %p139 = pneg %p138
    // Predicated region
    $region29: #{residual_block.1} parent=5 // pred_check
      _
    $region30: #{residual_block.1} parent=5 // pred_check_branch
      %141 = sbr.rel (%p138) target = $region32
    $region31: #{residual_block.1} parent=5 // pred_region
      %s142 = ssub.s32 %s9, 1
      %p143 = scmp.lt.s32.totalorder %s14, 1
      %s144 = scalar_select %p143, %s14, 1
      %s145 = smul.addr %s144, 32
      %s146 = smul.addr %s145, 8
      %s147 = scalar_lea.vmem %s0, %s146
      %p148 = pneg %p35
      %p149 = pneg %p32
      %p150 = pneg %p56
      %p151 = pneg %p53
      %p152 = pneg %p77
      %p153 = pneg %p74
      %p154 = pneg %p103
      %p155 = pneg %p100
      %p156 = scmp.lt.s32.totalorder %s14, 1
      %s157 = scalar_select %p156, %s14, 1
      %s158 = smul.addr %s157, 32
      %s159 = smul.addr %s158, 8
      %s160 = scalar_lea.vmem %s3, %s159
      %p161 = scmp.lt.s32.totalorder %s14, 1
      %s162 = scalar_select %p161, %s14, 1
      %s163 = smul.addr %s162, 32
      %s164 = smul.addr %s163, 8
      %s165 = scalar_lea.vmem %s0, %s164
      %p166 = scmp.lt.s32.totalorder %s14, 1
      %s167 = scalar_select %p166, %s14, 1
      %s168 = smul.addr %s167, 32
      %s169 = smul.addr %s168, 8
      %s170 = scalar_lea.vmem %s3, %s169
      %172 = vst [vmem:[#allocation3] sm:$0x1] 0.0
      %173 = vst [vmem:[#allocation4] sm:$0x1] 0.0
      loop: start=0, step=1, limit=4
      $region33: #{residual_block.1} parent=31 // loop_pre_header
        _
      $region34: #{residual_block.1} parent=31 // loop_header
        %s175 = sphi 0, %s179
        %p176 = scmp.ge.s32.totalorder %s175, 4
      $region35: #{residual_block.1} parent=31 // loop_header_branch
        %178 = sbr.rel (%p176) target = $region39
      $region36: #{residual_block.1} parent=31 // loop_body
        %s180 = smul.u32 %s175, 4
        %p181 = scmp.eq.s32.totalorder %s180, 0
        %s182 = ssub.s32 %s180, 1
        %s183 = scalar_select %p181, 1, %s182
        %s184 = sadd.s32 %s180, 4
        %p185 = scmp.ge.s32.totalorder %s184, 16
        %s186 = scalar_select %p185, 14, %s184
        %s187 = smul.u32 %s183, 16
        %s188 = scalar_lea.vmem %s165, %s187
        %v189 = vld [vmem:[%s188] sm:$0xff]
        %v190 = vld [vmem:[%s188 + $0x8] sm:$0xff]
        %s191 = smul.u32 %s180, 16
        %s192 = scalar_lea.vmem %s165, %s191
        %v193 = vld [vmem:[%s192] sm:$0xff]
        %v194 = vld [vmem:[%s192 + $0x8] sm:$0xff]
        %v195 = vld [vmem:[%s192 + $0x10] sm:$0xff]
        %v196 = vld [vmem:[%s192 + $0x18] sm:$0xff]
        %v197 = vld [vmem:[%s192 + $0x20] sm:$0xff]
        %v198 = vld [vmem:[%s192 + $0x28] sm:$0xff]
        %v199 = vld [vmem:[%s192 + $0x30] sm:$0xff]
        %v200 = vld [vmem:[%s192 + $0x38] sm:$0xff]
        %s201 = smul.u32 %s186, 16
        %s202 = scalar_lea.vmem %s165, %s201
        %v203 = vld [vmem:[%s202] sm:$0xff]
        %v204 = vld [vmem:[%s202 + $0x8] sm:$0xff]
        %v205 = vpack.c.bf16 %v190, %v189
        %v206 = vpack.c.bf16 %v194, %v193
        %v207 = vpack.c.bf16 %v196, %v195
        %v208 = vpack.c.bf16 %v198, %v197
        %v209 = vpack.c.bf16 %v200, %v199
        %v210 = vpack.c.bf16 %v204, %v203
        %v212 = vshrl.u32 %v205, 16
        %v215 = vshrl.u32 %v206, 16
        %v218 = vshrl.u32 %v207, 16
        %v221 = vshrl.u32 %v208, 16
        %v224 = vshrl.u32 %v209, 16
        %v227 = vshrl.u32 %v210, 16
        %v235 = vrot.slane %v212, 7
        %v236 = vshll.u32 %v205, 16
        %v238 = vor.u32 %v235, %v236
        %v239 = vrot.slane %v215, 7
        %v240 = vshll.u32 %v206, 16
        %v242 = vor.u32 %v239, %v240
        %v243 = vrot.slane %v218, 7
        %v244 = vshll.u32 %v207, 16
        %v246 = vor.u32 %v243, %v244
        %v247 = vrot.slane %v221, 7
        %v248 = vshll.u32 %v208, 16
        %v250 = vor.u32 %v247, %v248
        %v251 = vrot.slane %v224, 7
        %v252 = vshll.u32 %v209, 16
        %v254 = vor.u32 %v251, %v252
        %v255 = vrot.slane %v227, 7
        %v256 = vshll.u32 %v210, 16
        %v258 = vor.u32 %v255, %v256
        %vm265 = vcmask 1040384
        %vm266 = vsmask.f32 256
        %vm267 = vmand %vm265, %vm266
        %v268 = vsel %vm267, %v212, %v238
        %v269 = vsel %vm267, %v215, %v242
        %v270 = vsel %vm267, %v218, %v246
        %v271 = vsel %vm267, %v221, %v250
        %v272 = vsel %vm267, %v224, %v254
        %v273 = vsel %vm267, %v227, %v258
        %v274 = vrot.slane %v236, 1
        %v275 = vor.u32 %v212, %v274
        %v276 = vrot.slane %v240, 1
        %v277 = vor.u32 %v215, %v276
        %v278 = vrot.slane %v244, 1
        %v279 = vor.u32 %v218, %v278
        %v280 = vrot.slane %v248, 1
        %v281 = vor.u32 %v221, %v280
        %v282 = vrot.slane %v252, 1
        %v283 = vor.u32 %v224, %v282
        %v284 = vrot.slane %v256, 1
        %v285 = vor.u32 %v227, %v284
        %vm298 = vcmask 1047552
        %vm299 = vsmask.f32 7424
        %vm300 = vmand %vm298, %vm299
        %v301 = vsel %vm300, %v275, %v236
        %v302 = vsel %vm300, %v277, %v240
        %v303 = vsel %vm300, %v279, %v244
        %v304 = vsel %vm300, %v281, %v248
        %v305 = vsel %vm300, %v283, %v252
        %v306 = vsel %vm300, %v285, %v256
        %v307 = vld [vmem:[%s1] sm:$0xff]
        %v308 = vld [vmem:[%s1 + $0x8] sm:$0xf]
        %v309 = vld [vmem:[%s1 + $0xc] sm:$0xff]
        %v310 = vld [vmem:[%s1 + $0x14] sm:$0xf]
        %v311 = vld [vmem:[%s1 + $0x18] sm:$0xff]
        %v312 = vld [vmem:[%s1 + $0x20] sm:$0xf]
        %v313 = vld [vmem:[%s1 + $0x24] sm:$0xff]
        %v314 = vld [vmem:[%s1 + $0x2c] sm:$0xf]
        %v315 = vld [vmem:[%s1 + $0x30] sm:$0xff]
        %v316 = vld [vmem:[%s1 + $0x38] sm:$0xf]
        %v317 = vld [vmem:[%s1 + $0x3c] sm:$0xff]
        %v318 = vld [vmem:[%s1 + $0x44] sm:$0xf]
        %v319 = vld [vmem:[%s1 + $0x48] sm:$0xff]
        %v320 = vld [vmem:[%s1 + $0x50] sm:$0xf]
        %v321 = vld [vmem:[%s1 + $0x54] sm:$0xff]
        %v322 = vld [vmem:[%s1 + $0x5c] sm:$0xf]
        %v323 = vld [vmem:[%s1 + $0x60] sm:$0xff]
        %v324 = vld [vmem:[%s1 + $0x68] sm:$0xf]
        %v325 = vld [vmem:[%s1 + $0x6c] sm:$0xff]
        %v326 = vld [vmem:[%s1 + $0x74] sm:$0xf]
        %v327 = vld [vmem:[%s1 + $0x78] sm:$0xff]
        %v328 = vld [vmem:[%s1 + $0x80] sm:$0xf]
        %v329 = vld [vmem:[%s1 + $0x84] sm:$0xff]
        %v330 = vld [vmem:[%s1 + $0x8c] sm:$0xf]
        %v331 = vld [vmem:[%s1 + $0x90] sm:$0xff]
        %v332 = vld [vmem:[%s1 + $0x98] sm:$0xf]
        %v333 = vld [vmem:[%s1 + $0x9c] sm:$0xff]
        %v334 = vld [vmem:[%s1 + $0xa4] sm:$0xf]
        %v335 = vld [vmem:[%s1 + $0xa8] sm:$0xff]
        %v336 = vld [vmem:[%s1 + $0xb0] sm:$0xf]
        %v337 = vld [vmem:[%s1 + $0xb4] sm:$0xff]
        %v338 = vld [vmem:[%s1 + $0xbc] sm:$0xf]
        %v339 = vld [vmem:[%s1 + $0xc0] sm:$0xff]
        %v340 = vld [vmem:[%s1 + $0xc8] sm:$0xf]
        %v341 = vld [vmem:[%s1 + $0xcc] sm:$0xff]
        %v342 = vld [vmem:[%s1 + $0xd4] sm:$0xf]
        %v343 = vld [vmem:[%s1 + $0xd8] sm:$0xff]
        %v344 = vld [vmem:[%s1 + $0xe0] sm:$0xf]
        %v345 = vld [vmem:[%s1 + $0xe4] sm:$0xff]
        %v346 = vld [vmem:[%s1 + $0xec] sm:$0xf]
        %v347 = vld [vmem:[%s1 + $0xf0] sm:$0xff]
        %v348 = vld [vmem:[%s1 + $0xf8] sm:$0xf]
        %v349 = vld [vmem:[%s1 + $0xfc] sm:$0xff]
        %v350 = vld [vmem:[%s1 + $0x104] sm:$0xf]
        %v351 = vld [vmem:[%s1 + $0x108] sm:$0xff]
        %v352 = vld [vmem:[%s1 + $0x110] sm:$0xf]
        %v353 = vld [vmem:[%s1 + $0x114] sm:$0xff]
        %v354 = vld [vmem:[%s1 + $0x11c] sm:$0xf]
        %v355 = vld [vmem:[%s1 + $0x120] sm:$0xff]
        %v356 = vld [vmem:[%s1 + $0x128] sm:$0xf]
        %v357 = vld [vmem:[%s1 + $0x12c] sm:$0xff]
        %v358 = vld [vmem:[%s1 + $0x134] sm:$0xf]
        %v359 = vld [vmem:[%s1 + $0x138] sm:$0xff]
        %v360 = vld [vmem:[%s1 + $0x140] sm:$0xf]
        %v361 = vld [vmem:[%s1 + $0x144] sm:$0xff]
        %v362 = vld [vmem:[%s1 + $0x14c] sm:$0xf]
        %v363 = vld [vmem:[%s1 + $0x150] sm:$0xff]
        %v364 = vld [vmem:[%s1 + $0x158] sm:$0xf]
        %v365 = vld [vmem:[%s1 + $0x15c] sm:$0xff]
        %v366 = vld [vmem:[%s1 + $0x164] sm:$0xf]
        %v367 = vld [vmem:[%s1 + $0x168] sm:$0xff]
        %v368 = vld [vmem:[%s1 + $0x170] sm:$0xf]
        %v369 = vld [vmem:[%s1 + $0x174] sm:$0xff]
        %v370 = vld [vmem:[%s1 + $0x17c] sm:$0xf]
        %v371 = vld [vmem:[%s1 + $0x180] sm:$0xff]
        %v372 = vld [vmem:[%s1 + $0x188] sm:$0xf]
        %v373 = vld [vmem:[%s1 + $0x18c] sm:$0xff]
        %v374 = vld [vmem:[%s1 + $0x194] sm:$0xf]
        %v375 = vld [vmem:[%s1 + $0x198] sm:$0xff]
        %v376 = vld [vmem:[%s1 + $0x1a0] sm:$0xf]
        %v377 = vld [vmem:[%s1 + $0x1a4] sm:$0xff]
        %v378 = vld [vmem:[%s1 + $0x1ac] sm:$0xf]
        %v379 = vld [vmem:[%s1 + $0x1b0] sm:$0xff]
        %v380 = vld [vmem:[%s1 + $0x1b8] sm:$0xf]
        %v381 = vld [vmem:[%s1 + $0x1bc] sm:$0xff]
        %v382 = vld [vmem:[%s1 + $0x1c4] sm:$0xf]
        %v383 = vld [vmem:[%s1 + $0x1c8] sm:$0xff]
        %v384 = vld [vmem:[%s1 + $0x1d0] sm:$0xf]
        %v385 = vld [vmem:[%s1 + $0x1d4] sm:$0xff]
        %v386 = vld [vmem:[%s1 + $0x1dc] sm:$0xf]
        %v387 = vld [vmem:[%s1 + $0x1e0] sm:$0xff]
        %v388 = vld [vmem:[%s1 + $0x1e8] sm:$0xf]
        %v389 = vld [vmem:[%s1 + $0x1ec] sm:$0xff]
        %v390 = vld [vmem:[%s1 + $0x1f4] sm:$0xf]
        %v391 = vld [vmem:[%s1 + $0x1f8] sm:$0xff]
        %v392 = vld [vmem:[%s1 + $0x200] sm:$0xf]
        %v393 = vld [vmem:[%s1 + $0x204] sm:$0xff]
        %v394 = vld [vmem:[%s1 + $0x20c] sm:$0xf]
        %v395 = vld [vmem:[%s1 + $0x210] sm:$0xff]
        %v396 = vld [vmem:[%s1 + $0x218] sm:$0xf]
        %v397 = vld [vmem:[%s1 + $0x21c] sm:$0xff]
        %v398 = vld [vmem:[%s1 + $0x224] sm:$0xf]
        %v399 = vld [vmem:[%s1 + $0x228] sm:$0xff]
        %v400 = vld [vmem:[%s1 + $0x230] sm:$0xf]
        %v401 = vld [vmem:[%s1 + $0x234] sm:$0xff]
        %v402 = vld [vmem:[%s1 + $0x23c] sm:$0xf]
        %v499 = vunpack.c.l.b16 %v307
        %v500 = vunpack.c.h.b16 %v307
        %v501 = vunpack.c.l.b16 %v308
        %v502 = vunpack.c.l.b16 %v309
        %v503 = vunpack.c.h.b16 %v309
        %v504 = vunpack.c.l.b16 %v310
        %v505 = vunpack.c.l.b16 %v311
        %v506 = vunpack.c.h.b16 %v311
        %v507 = vunpack.c.l.b16 %v312
        %v508 = vunpack.c.l.b16 %v313
        %v509 = vunpack.c.h.b16 %v313
        %v510 = vunpack.c.l.b16 %v314
        %v511 = vunpack.c.l.b16 %v315
        %v512 = vunpack.c.h.b16 %v315
        %v513 = vunpack.c.l.b16 %v316
        %v514 = vunpack.c.l.b16 %v317
        %v515 = vunpack.c.h.b16 %v317
        %v516 = vunpack.c.l.b16 %v318
        %v517 = vunpack.c.l.b16 %v319
        %v518 = vunpack.c.h.b16 %v319
        %v519 = vunpack.c.l.b16 %v320
        %v520 = vunpack.c.l.b16 %v321
        %v521 = vunpack.c.h.b16 %v321
        %v522 = vunpack.c.l.b16 %v322
        %v523 = vunpack.c.l.b16 %v323
        %v524 = vunpack.c.h.b16 %v323
        %v525 = vunpack.c.l.b16 %v324
        %v526 = vunpack.c.l.b16 %v325
        %v527 = vunpack.c.h.b16 %v325
        %v528 = vunpack.c.l.b16 %v326
        %v529 = vunpack.c.l.b16 %v327
        %v530 = vunpack.c.h.b16 %v327
        %v531 = vunpack.c.l.b16 %v328
        %v532 = vunpack.c.l.b16 %v329
        %v533 = vunpack.c.h.b16 %v329
        %v534 = vunpack.c.l.b16 %v330
        %v535 = vunpack.c.l.b16 %v331
        %v536 = vunpack.c.h.b16 %v331
        %v537 = vunpack.c.l.b16 %v332
        %v538 = vunpack.c.l.b16 %v333
        %v539 = vunpack.c.h.b16 %v333
        %v540 = vunpack.c.l.b16 %v334
        %v541 = vunpack.c.l.b16 %v335
        %v542 = vunpack.c.h.b16 %v335
        %v543 = vunpack.c.l.b16 %v336
        %v544 = vunpack.c.l.b16 %v337
        %v545 = vunpack.c.h.b16 %v337
        %v546 = vunpack.c.l.b16 %v338
        %v547 = vunpack.c.l.b16 %v339
        %v548 = vunpack.c.h.b16 %v339
        %v549 = vunpack.c.l.b16 %v340
        %v550 = vunpack.c.l.b16 %v341
        %v551 = vunpack.c.h.b16 %v341
        %v552 = vunpack.c.l.b16 %v342
        %v553 = vunpack.c.l.b16 %v343
        %v554 = vunpack.c.h.b16 %v343
        %v555 = vunpack.c.l.b16 %v344
        %v556 = vunpack.c.l.b16 %v345
        %v557 = vunpack.c.h.b16 %v345
        %v558 = vunpack.c.l.b16 %v346
        %v559 = vunpack.c.l.b16 %v347
        %v560 = vunpack.c.h.b16 %v347
        %v561 = vunpack.c.l.b16 %v348
        %v562 = vunpack.c.l.b16 %v349
        %v563 = vunpack.c.h.b16 %v349
        %v564 = vunpack.c.l.b16 %v350
        %v565 = vunpack.c.l.b16 %v351
        %v566 = vunpack.c.h.b16 %v351
        %v567 = vunpack.c.l.b16 %v352
        %v568 = vunpack.c.l.b16 %v353
        %v569 = vunpack.c.h.b16 %v353
        %v570 = vunpack.c.l.b16 %v354
        %v571 = vunpack.c.l.b16 %v355
        %v572 = vunpack.c.h.b16 %v355
        %v573 = vunpack.c.l.b16 %v356
        %v574 = vunpack.c.l.b16 %v357
        %v575 = vunpack.c.h.b16 %v357
        %v576 = vunpack.c.l.b16 %v358
        %v577 = vunpack.c.l.b16 %v359
        %v578 = vunpack.c.h.b16 %v359
        %v579 = vunpack.c.l.b16 %v360
        %v580 = vunpack.c.l.b16 %v361
        %v581 = vunpack.c.h.b16 %v361
        %v582 = vunpack.c.l.b16 %v362
        %v583 = vunpack.c.l.b16 %v363
        %v584 = vunpack.c.h.b16 %v363
        %v585 = vunpack.c.l.b16 %v364
        %v586 = vunpack.c.l.b16 %v365
        %v587 = vunpack.c.h.b16 %v365
        %v588 = vunpack.c.l.b16 %v366
        %v589 = vunpack.c.l.b16 %v367
        %v590 = vunpack.c.h.b16 %v367
        %v591 = vunpack.c.l.b16 %v368
        %v592 = vunpack.c.l.b16 %v369
        %v593 = vunpack.c.h.b16 %v369
        %v594 = vunpack.c.l.b16 %v370
        %v595 = vunpack.c.l.b16 %v371
        %v596 = vunpack.c.h.b16 %v371
        %v597 = vunpack.c.l.b16 %v372
        %v598 = vunpack.c.l.b16 %v373
        %v599 = vunpack.c.h.b16 %v373
        %v600 = vunpack.c.l.b16 %v374
        %v601 = vunpack.c.l.b16 %v375
        %v602 = vunpack.c.h.b16 %v375
        %v603 = vunpack.c.l.b16 %v376
        %v604 = vunpack.c.l.b16 %v377
        %v605 = vunpack.c.h.b16 %v377
        %v606 = vunpack.c.l.b16 %v378
        %v607 = vunpack.c.l.b16 %v379
        %v608 = vunpack.c.h.b16 %v379
        %v609 = vunpack.c.l.b16 %v380
        %v610 = vunpack.c.l.b16 %v381
        %v611 = vunpack.c.h.b16 %v381
        %v612 = vunpack.c.l.b16 %v382
        %v613 = vunpack.c.l.b16 %v383
        %v614 = vunpack.c.h.b16 %v383
        %v615 = vunpack.c.l.b16 %v384
        %v616 = vunpack.c.l.b16 %v385
        %v617 = vunpack.c.h.b16 %v385
        %v618 = vunpack.c.l.b16 %v386
        %v619 = vunpack.c.l.b16 %v387
        %v620 = vunpack.c.h.b16 %v387
        %v621 = vunpack.c.l.b16 %v388
        %v622 = vunpack.c.l.b16 %v389
        %v623 = vunpack.c.h.b16 %v389
        %v624 = vunpack.c.l.b16 %v390
        %v625 = vunpack.c.l.b16 %v391
        %v626 = vunpack.c.h.b16 %v391
        %v627 = vunpack.c.l.b16 %v392
        %v628 = vunpack.c.l.b16 %v393
        %v629 = vunpack.c.h.b16 %v393
        %v630 = vunpack.c.l.b16 %v394
        %v631 = vunpack.c.l.b16 %v395
        %v632 = vunpack.c.h.b16 %v395
        %v633 = vunpack.c.l.b16 %v396
        %v634 = vunpack.c.l.b16 %v397
        %v635 = vunpack.c.h.b16 %v397
        %v636 = vunpack.c.l.b16 %v398
        %v637 = vunpack.c.l.b16 %v399
        %v638 = vunpack.c.h.b16 %v399
        %v639 = vunpack.c.l.b16 %v400
        %v640 = vunpack.c.l.b16 %v401
        %v641 = vunpack.c.h.b16 %v401
        %v642 = vunpack.c.l.b16 %v402
        %v643 = vpack.c.b16 %v502, %v499
        %v644 = vpack.c.b16 %v503, %v500
        %v645 = vpack.c.b16 %v504, %v501
        %v646 = vpack.c.b16 %v508, %v505
        %v647 = vpack.c.b16 %v509, %v506
        %v648 = vpack.c.b16 %v510, %v507
        %v649 = vpack.c.b16 %v514, %v511
        %v650 = vpack.c.b16 %v515, %v512
        %v651 = vpack.c.b16 %v516, %v513
        %v652 = vpack.c.b16 %v520, %v517
        %v653 = vpack.c.b16 %v521, %v518
        %v654 = vpack.c.b16 %v522, %v519
        %v655 = vpack.c.b16 %v526, %v523
        %v656 = vpack.c.b16 %v527, %v524
        %v657 = vpack.c.b16 %v528, %v525
        %v658 = vpack.c.b16 %v532, %v529
        %v659 = vpack.c.b16 %v533, %v530
        %v660 = vpack.c.b16 %v534, %v531
        %v661 = vpack.c.b16 %v538, %v535
        %v662 = vpack.c.b16 %v539, %v536
        %v663 = vpack.c.b16 %v540, %v537
        %v664 = vpack.c.b16 %v544, %v541
        %v665 = vpack.c.b16 %v545, %v542
        %v666 = vpack.c.b16 %v546, %v543
        %v667 = vpack.c.b16 %v550, %v547
        %v668 = vpack.c.b16 %v551, %v548
        %v669 = vpack.c.b16 %v552, %v549
        %v670 = vpack.c.b16 %v556, %v553
        %v671 = vpack.c.b16 %v557, %v554
        %v672 = vpack.c.b16 %v558, %v555
        %v673 = vpack.c.b16 %v562, %v559
        %v674 = vpack.c.b16 %v563, %v560
        %v675 = vpack.c.b16 %v564, %v561
        %v676 = vpack.c.b16 %v568, %v565
        %v677 = vpack.c.b16 %v569, %v566
        %v678 = vpack.c.b16 %v570, %v567
        %v679 = vpack.c.b16 %v574, %v571
        %v680 = vpack.c.b16 %v575, %v572
        %v681 = vpack.c.b16 %v576, %v573
        %v682 = vpack.c.b16 %v580, %v577
        %v683 = vpack.c.b16 %v581, %v578
        %v684 = vpack.c.b16 %v582, %v579
        %v685 = vpack.c.b16 %v586, %v583
        %v686 = vpack.c.b16 %v587, %v584
        %v687 = vpack.c.b16 %v588, %v585
        %v688 = vpack.c.b16 %v592, %v589
        %v689 = vpack.c.b16 %v593, %v590
        %v690 = vpack.c.b16 %v594, %v591
        %v691 = vpack.c.b16 %v598, %v595
        %v692 = vpack.c.b16 %v599, %v596
        %v693 = vpack.c.b16 %v600, %v597
        %v694 = vpack.c.b16 %v604, %v601
        %v695 = vpack.c.b16 %v605, %v602
        %v696 = vpack.c.b16 %v606, %v603
        %v697 = vpack.c.b16 %v610, %v607
        %v698 = vpack.c.b16 %v611, %v608
        %v699 = vpack.c.b16 %v612, %v609
        %v700 = vpack.c.b16 %v616, %v613
        %v701 = vpack.c.b16 %v617, %v614
        %v702 = vpack.c.b16 %v618, %v615
        %v703 = vpack.c.b16 %v622, %v619
        %v704 = vpack.c.b16 %v623, %v620
        %v705 = vpack.c.b16 %v624, %v621
        %v706 = vpack.c.b16 %v628, %v625
        %v707 = vpack.c.b16 %v629, %v626
        %v708 = vpack.c.b16 %v630, %v627
        %v709 = vpack.c.b16 %v634, %v631
        %v710 = vpack.c.b16 %v635, %v632
        %v711 = vpack.c.b16 %v636, %v633
        %v712 = vpack.c.b16 %v640, %v637
        %v713 = vpack.c.b16 %v641, %v638
        %v714 = vpack.c.b16 %v642, %v639
        %787 = vmatprep.subr.bf16.mxu0 %v665
        %788 = vmatpush1.bf16.msra.mxu0 %v664
        %789 = vmatprep.subr.bf16.mxu0 %v662
        %790 = vmatpush1.bf16.msra.mxu0 %v661
        %791 = vmatprep.subr.bf16.mxu0 %v659
        %792 = vmatpush1.bf16.msra.mxu0 %v658
        %793 = vmatprep.subr.bf16.mxu0 %v656
        %794 = vmatpush1.bf16.msra.mxu0 %v655
        %795 = vmatprep.subr.bf16.mxu0 %v653
        %796 = vmatpush1.bf16.msra.mxu0 %v652
        %797 = vmatprep.subr.bf16.mxu0 %v650
        %798 = vmatpush1.bf16.msra.mxu0 %v649
        %799 = vmatprep.subr.bf16.mxu0 %v647
        %800 = vmatpush1.bf16.msra.mxu0 %v646
        %801 = vmatprep.subr.bf16.mxu0 %v644
        %802 = vmatpush1.bf16.msra.mxu0 %v643
        %803 = vmatprep.subr.bf16.mxu0 %v689
        %804 = vmatpush2.bf16.msra.mxu0 %v688
        %805 = vmatprep.subr.bf16.mxu0 %v686
        %806 = vmatpush2.bf16.msra.mxu0 %v685
        %807 = vmatprep.subr.bf16.mxu0 %v683
        %808 = vmatpush2.bf16.msra.mxu0 %v682
        %809 = vmatprep.subr.bf16.mxu0 %v680
        %810 = vmatpush2.bf16.msra.mxu0 %v679
        %811 = vmatprep.subr.bf16.mxu0 %v677
        %812 = vmatpush2.bf16.msra.mxu0 %v676
        %813 = vmatprep.subr.bf16.mxu0 %v674
        %814 = vmatpush2.bf16.msra.mxu0 %v673
        %815 = vmatprep.subr.bf16.mxu0 %v671
        %816 = vmatpush2.bf16.msra.mxu0 %v670
        %817 = vmatprep.subr.bf16.mxu0 %v668
        %818 = vmatpush2.bf16.msra.mxu0 %v667
        %819 = vmatprep.mubr.bf16.mxu0 %v205
        %820 = vmatmul.mubr.bf16.gmra.mxu0 %v268
        %v821 = vpop.f32.mrf.mxu0
        %v822 = vadd.f32 0.0, %v821
        %v823 = vpop.f32.mrf.mxu0
        %v824 = vpop.f32.mrf.mxu0
        %v825 = vadd.f32 0.0, %v824
        %v826 = vpop.f32.mrf.mxu0
        %827 = vmatprep.mubr.bf16.mxu0 %v206
        %828 = vmatmul.mubr.bf16.gmra.mxu0 %v269
        %v829 = vpop.f32.mrf.mxu0
        %v830 = vadd.f32 0.0, %v829
        %v831 = vpop.f32.mrf.mxu0
        %v832 = vadd.f32 0.0, %v831
        %v833 = vpop.f32.mrf.mxu0
        %v834 = vadd.f32 0.0, %v833
        %v835 = vpop.f32.mrf.mxu0
        %v836 = vadd.f32 0.0, %v835
        %837 = vmatprep.mubr.bf16.mxu0 %v207
        %838 = vmatmul.mubr.bf16.gmra.mxu0 %v270
        %v839 = vpop.f32.mrf.mxu0
        %v840 = vadd.f32 0.0, %v839
        %v841 = vpop.f32.mrf.mxu0
        %v842 = vadd.f32 0.0, %v841
        %v843 = vpop.f32.mrf.mxu0
        %v844 = vadd.f32 0.0, %v843
        %v845 = vpop.f32.mrf.mxu0
        %v846 = vadd.f32 0.0, %v845
        %847 = vmatprep.mubr.bf16.mxu0 %v208
        %848 = vmatmul.mubr.bf16.gmra.mxu0 %v271
        %v849 = vpop.f32.mrf.mxu0
        %v850 = vadd.f32 0.0, %v849
        %v851 = vpop.f32.mrf.mxu0
        %v852 = vadd.f32 0.0, %v851
        %v853 = vpop.f32.mrf.mxu0
        %v854 = vadd.f32 0.0, %v853
        %v855 = vpop.f32.mrf.mxu0
        %v856 = vadd.f32 0.0, %v855
        %857 = vmatprep.mubr.bf16.mxu0 %v209
        %858 = vmatmul.mubr.bf16.gmra.mxu0 %v272
        %v859 = vpop.f32.mrf.mxu0
        %v860 = vpop.f32.mrf.mxu0
        %v861 = vadd.f32 0.0, %v860
        %v862 = vpop.f32.mrf.mxu0
        %v863 = vpop.f32.mrf.mxu0
        %v864 = vadd.f32 0.0, %v863
        %865 = vmatprep.mubr.bf16.mxu0 %v210
        %866 = vmatmul.mubr.bf16.gmra.mxu0 %v273
        %v867 = vpop.f32.mrf.mxu0
        %v868 = vpop.f32.mrf.mxu0
        %v869 = vpop.f32.mrf.mxu0
        %v870 = vpop.f32.mrf.mxu0
        %871 = vdwg.mxu0
        %872 = vmatprep.subr.bf16.mxu0 %v713
        %873 = vmatpush1.bf16.msra.mxu0 %v712
        %874 = vmatprep.subr.bf16.mxu0 %v710
        %875 = vmatpush1.bf16.msra.mxu0 %v709
        %876 = vmatprep.subr.bf16.mxu0 %v707
        %877 = vmatpush1.bf16.msra.mxu0 %v706
        %878 = vmatprep.subr.bf16.mxu0 %v704
        %879 = vmatpush1.bf16.msra.mxu0 %v703
        %880 = vmatprep.subr.bf16.mxu0 %v701
        %881 = vmatpush1.bf16.msra.mxu0 %v700
        %882 = vmatprep.subr.bf16.mxu0 %v698
        %883 = vmatpush1.bf16.msra.mxu0 %v697
        %884 = vmatprep.subr.bf16.mxu0 %v695
        %885 = vmatpush1.bf16.msra.mxu0 %v694
        %886 = vmatprep.subr.bf16.mxu0 %v692
        %887 = vmatpush1.bf16.msra.mxu0 %v691
        %888 = vmatprep.subr.bf16.mxu0 0
        %889 = vmatpush2.bf16.msra.mxu0 0
        %890 = vmatprep.subr.bf16.mxu0 0
        %891 = vmatpush2.bf16.msra.mxu0 0
        %892 = vmatprep.subr.bf16.mxu0 0
        %893 = vmatpush2.bf16.msra.mxu0 0
        %894 = vmatprep.subr.bf16.mxu0 0
        %895 = vmatpush2.bf16.msra.mxu0 0
        %896 = vmatprep.subr.bf16.mxu0 0
        %897 = vmatpush2.bf16.msra.mxu0 0
        %898 = vmatprep.subr.bf16.mxu0 0
        %899 = vmatpush2.bf16.msra.mxu0 0
        %900 = vmatprep.subr.bf16.mxu0 0
        %901 = vmatpush2.bf16.msra.mxu0 0
        %902 = vmatprep.subr.bf16.mxu0 0
        %903 = vmatpush2.bf16.msra.mxu0 0
        %904 = vmatprep.mubr.bf16.mxu0 0
        %905 = vmatmul.mubr.bf16.gmra.mxu0 %v301
        %v906 = vpop.f32.mrf.mxu0
        %v907 = vadd.f32 %v822, %v906
        %v908 = vpop.f32.mrf.mxu0
        %v909 = vpop.f32.mrf.mxu0
        %v910 = vadd.f32 %v825, %v909
        %v911 = vpop.f32.mrf.mxu0
        %912 = vmatprep.mubr.bf16.mxu0 0
        %913 = vmatmul.mubr.bf16.gmra.mxu0 %v302
        %v914 = vpop.f32.mrf.mxu0
        %v915 = vadd.f32 %v830, %v914
        %v916 = vpop.f32.mrf.mxu0
        %v917 = vadd.f32 %v832, %v916
        %v918 = vpop.f32.mrf.mxu0
        %v919 = vadd.f32 %v834, %v918
        %v920 = vpop.f32.mrf.mxu0
        %v921 = vadd.f32 %v836, %v920
        %922 = vmatprep.mubr.bf16.mxu0 0
        %923 = vmatmul.mubr.bf16.gmra.mxu0 %v303
        %v924 = vpop.f32.mrf.mxu0
        %v925 = vadd.f32 %v840, %v924
        %v926 = vpop.f32.mrf.mxu0
        %v927 = vadd.f32 %v842, %v926
        %v928 = vpop.f32.mrf.mxu0
        %v929 = vadd.f32 %v844, %v928
        %v930 = vpop.f32.mrf.mxu0
        %v931 = vadd.f32 %v846, %v930
        %932 = vmatprep.mubr.bf16.mxu0 0
        %933 = vmatmul.mubr.bf16.gmra.mxu0 %v304
        %v934 = vpop.f32.mrf.mxu0
        %v935 = vadd.f32 %v850, %v934
        %v936 = vpop.f32.mrf.mxu0
        %v937 = vadd.f32 %v852, %v936
        %v938 = vpop.f32.mrf.mxu0
        %v939 = vadd.f32 %v854, %v938
        %v940 = vpop.f32.mrf.mxu0
        %v941 = vadd.f32 %v856, %v940
        %942 = vmatprep.mubr.bf16.mxu0 0
        %943 = vmatmul.mubr.bf16.gmra.mxu0 %v305
        %v944 = vpop.f32.mrf.mxu0
        %v945 = vpop.f32.mrf.mxu0
        %v946 = vadd.f32 %v861, %v945
        %v947 = vpop.f32.mrf.mxu0
        %v948 = vpop.f32.mrf.mxu0
        %v949 = vadd.f32 %v864, %v948
        %950 = vmatprep.mubr.bf16.mxu0 0
        %951 = vmatmul.mubr.bf16.gmra.mxu0 %v306
        %v952 = vpop.f32.mrf.mxu0
        %v953 = vpop.f32.mrf.mxu0
        %v954 = vpop.f32.mrf.mxu0
        %v955 = vpop.f32.mrf.mxu0
        %956 = vdwg.mxu0
        %957 = vmatprep.subr.bf16.mxu0 0
        %958 = vmatpush1.bf16.msra.mxu0 %v666
        %959 = vmatprep.subr.bf16.mxu0 0
        %960 = vmatpush1.bf16.msra.mxu0 %v663
        %961 = vmatprep.subr.bf16.mxu0 0
        %962 = vmatpush1.bf16.msra.mxu0 %v660
        %963 = vmatprep.subr.bf16.mxu0 0
        %964 = vmatpush1.bf16.msra.mxu0 %v657
        %965 = vmatprep.subr.bf16.mxu0 0
        %966 = vmatpush1.bf16.msra.mxu0 %v654
        %967 = vmatprep.subr.bf16.mxu0 0
        %968 = vmatpush1.bf16.msra.mxu0 %v651
        %969 = vmatprep.subr.bf16.mxu0 0
        %970 = vmatpush1.bf16.msra.mxu0 %v648
        %971 = vmatprep.subr.bf16.mxu0 0
        %972 = vmatpush1.bf16.msra.mxu0 %v645
        %973 = vmatprep.subr.bf16.mxu0 0
        %974 = vmatpush2.bf16.msra.mxu0 %v690
        %975 = vmatprep.subr.bf16.mxu0 0
        %976 = vmatpush2.bf16.msra.mxu0 %v687
        %977 = vmatprep.subr.bf16.mxu0 0
        %978 = vmatpush2.bf16.msra.mxu0 %v684
        %979 = vmatprep.subr.bf16.mxu0 0
        %980 = vmatpush2.bf16.msra.mxu0 %v681
        %981 = vmatprep.subr.bf16.mxu0 0
        %982 = vmatpush2.bf16.msra.mxu0 %v678
        %983 = vmatprep.subr.bf16.mxu0 0
        %984 = vmatpush2.bf16.msra.mxu0 %v675
        %985 = vmatprep.subr.bf16.mxu0 0
        %986 = vmatpush2.bf16.msra.mxu0 %v672
        %987 = vmatprep.subr.bf16.mxu0 0
        %988 = vmatpush2.bf16.msra.mxu0 %v669
        %989 = vmatprep.mubr.bf16.mxu0 %v205
        %990 = vmatmul.mubr.bf16.gmra.mxu0 %v268
        %v991 = vpop.f32.mrf.mxu0
        %v992 = vpop.f32.mrf.mxu0
        %v993 = vpop.f32.mrf.mxu0
        %v994 = vpop.f32.mrf.mxu0
        %995 = vmatprep.mubr.bf16.mxu0 %v206
        %996 = vmatmul.mubr.bf16.gmra.mxu0 %v269
        %v997 = vpop.f32.mrf.mxu0
        %v998 = vpop.f32.mrf.mxu0
        %v999 = vpop.f32.mrf.mxu0
        %v1000 = vpop.f32.mrf.mxu0
        %1001 = vmatprep.mubr.bf16.mxu0 %v207
        %1002 = vmatmul.mubr.bf16.gmra.mxu0 %v270
        %v1003 = vpop.f32.mrf.mxu0
        %v1004 = vadd.f32 0.0, %v1003
        %v1005 = vpop.f32.mrf.mxu0
        %v1006 = vpop.f32.mrf.mxu0
        %v1007 = vadd.f32 0.0, %v1006
        %v1008 = vpop.f32.mrf.mxu0
        %1009 = vmatprep.mubr.bf16.mxu0 %v208
        %1010 = vmatmul.mubr.bf16.gmra.mxu0 %v271
        %v1011 = vpop.f32.mrf.mxu0
        %v1012 = vadd.f32 0.0, %v1011
        %v1013 = vpop.f32.mrf.mxu0
        %v1014 = vpop.f32.mrf.mxu0
        %v1015 = vadd.f32 0.0, %v1014
        %v1016 = vpop.f32.mrf.mxu0
        %1017 = vmatprep.mubr.bf16.mxu0 %v209
        %1018 = vmatmul.mubr.bf16.gmra.mxu0 %v272
        %v1019 = vpop.f32.mrf.mxu0
        %v1020 = vadd.f32 0.0, %v1019
        %v1021 = vpop.f32.mrf.mxu0
        %v1022 = vpop.f32.mrf.mxu0
        %v1023 = vadd.f32 0.0, %v1022
        %v1024 = vpop.f32.mrf.mxu0
        %1025 = vmatprep.mubr.bf16.mxu0 %v210
        %1026 = vmatmul.mubr.bf16.gmra.mxu0 %v273
        %v1027 = vpop.f32.mrf.mxu0
        %v1028 = vadd.f32 0.0, %v1027
        %v1029 = vpop.f32.mrf.mxu0
        %v1030 = vpop.f32.mrf.mxu0
        %v1031 = vadd.f32 0.0, %v1030
        %v1032 = vpop.f32.mrf.mxu0
        %1033 = vdwg.mxu0
        %1034 = vmatprep.subr.bf16.mxu0 0
        %1035 = vmatpush1.bf16.msra.mxu0 %v714
        %1036 = vmatprep.subr.bf16.mxu0 0
        %1037 = vmatpush1.bf16.msra.mxu0 %v711
        %1038 = vmatprep.subr.bf16.mxu0 0
        %1039 = vmatpush1.bf16.msra.mxu0 %v708
        %1040 = vmatprep.subr.bf16.mxu0 0
        %1041 = vmatpush1.bf16.msra.mxu0 %v705
        %1042 = vmatprep.subr.bf16.mxu0 0
        %1043 = vmatpush1.bf16.msra.mxu0 %v702
        %1044 = vmatprep.subr.bf16.mxu0 0
        %1045 = vmatpush1.bf16.msra.mxu0 %v699
        %1046 = vmatprep.subr.bf16.mxu0 0
        %1047 = vmatpush1.bf16.msra.mxu0 %v696
        %1048 = vmatprep.subr.bf16.mxu0 0
        %1049 = vmatpush1.bf16.msra.mxu0 %v693
        %1050 = vmatprep.subr.bf16.mxu0 0
        %1051 = vmatpush2.bf16.msra.mxu0 0
        %1052 = vmatprep.subr.bf16.mxu0 0
        %1053 = vmatpush2.bf16.msra.mxu0 0
        %1054 = vmatprep.subr.bf16.mxu0 0
        %1055 = vmatpush2.bf16.msra.mxu0 0
        %1056 = vmatprep.subr.bf16.mxu0 0
        %1057 = vmatpush2.bf16.msra.mxu0 0
        %1058 = vmatprep.subr.bf16.mxu0 0
        %1059 = vmatpush2.bf16.msra.mxu0 0
        %1060 = vmatprep.subr.bf16.mxu0 0
        %1061 = vmatpush2.bf16.msra.mxu0 0
        %1062 = vmatprep.subr.bf16.mxu0 0
        %1063 = vmatpush2.bf16.msra.mxu0 0
        %1064 = vmatprep.subr.bf16.mxu0 0
        %1065 = vmatpush2.bf16.msra.mxu0 0
        %1066 = vmatprep.mubr.bf16.mxu0 0
        %1067 = vmatmul.mubr.bf16.gmra.mxu0 %v301
        %v1068 = vpop.f32.mrf.mxu0
        %v1069 = vpop.f32.mrf.mxu0
        %v1070 = vpop.f32.mrf.mxu0
        %v1071 = vpop.f32.mrf.mxu0
        %1072 = vmatprep.mubr.bf16.mxu0 0
        %1073 = vmatmul.mubr.bf16.gmra.mxu0 %v302
        %v1074 = vpop.f32.mrf.mxu0
        %v1075 = vpop.f32.mrf.mxu0
        %v1076 = vpop.f32.mrf.mxu0
        %v1077 = vpop.f32.mrf.mxu0
        %1078 = vmatprep.mubr.bf16.mxu0 0
        %1079 = vmatmul.mubr.bf16.gmra.mxu0 %v303
        %v1080 = vpop.f32.mrf.mxu0
        %v1081 = vadd.f32 %v1004, %v1080
        %v1082 = vpop.f32.mrf.mxu0
        %v1083 = vpop.f32.mrf.mxu0
        %v1084 = vadd.f32 %v1007, %v1083
        %v1085 = vpop.f32.mrf.mxu0
        %1086 = vmatprep.mubr.bf16.mxu0 0
        %1087 = vmatmul.mubr.bf16.gmra.mxu0 %v304
        %v1088 = vpop.f32.mrf.mxu0
        %v1089 = vadd.f32 %v1012, %v1088
        %v1090 = vpop.f32.mrf.mxu0
        %v1091 = vpop.f32.mrf.mxu0
        %v1092 = vadd.f32 %v1015, %v1091
        %v1093 = vpop.f32.mrf.mxu0
        %1094 = vmatprep.mubr.bf16.mxu0 0
        %1095 = vmatmul.mubr.bf16.gmra.mxu0 %v305
        %v1096 = vpop.f32.mrf.mxu0
        %v1097 = vadd.f32 %v1020, %v1096
        %v1098 = vpop.f32.mrf.mxu0
        %v1099 = vpop.f32.mrf.mxu0
        %v1100 = vadd.f32 %v1023, %v1099
        %v1101 = vpop.f32.mrf.mxu0
        %1102 = vmatprep.mubr.bf16.mxu0 0
        %1103 = vmatmul.mubr.bf16.gmra.mxu0 %v306
        %v1104 = vpop.f32.mrf.mxu0
        %v1105 = vadd.f32 %v1028, %v1104
        %v1106 = vpop.f32.mrf.mxu0
        %v1107 = vpop.f32.mrf.mxu0
        %v1108 = vadd.f32 %v1031, %v1107
        %v1109 = vpop.f32.mrf.mxu0
        %1110 = vdwg.mxu0
        %v1111 = vadd.f32 %v907, %v917
        %v1112 = vadd.f32 %v910, %v921
        %v1113 = vadd.f32 %v915, %v927
        %v1114 = vadd.f32 %v919, %v931
        %v1115 = vadd.f32 %v925, %v937
        %v1116 = vadd.f32 %v929, %v941
        %v1117 = vadd.f32 %v935, %v946
        %v1118 = vadd.f32 %v939, %v949
        %v1119 = vadd.f32 %v1111, %v1081
        %v1120 = vadd.f32 %v1112, %v1084
        %v1121 = vadd.f32 %v1113, %v1089
        %v1122 = vadd.f32 %v1114, %v1092
        %v1123 = vadd.f32 %v1115, %v1097
        %v1124 = vadd.f32 %v1116, %v1100
        %v1125 = vadd.f32 %v1117, %v1105
        %v1126 = vadd.f32 %v1118, %v1108
        %v1127 = vld [vmem:[#allocation3] sm:$0x1]
        %v1128 = vadd.f32 %v1119, %v1120
        %v1129 = vadd.f32 %v1128, %v1121
        %v1130 = vadd.f32 %v1129, %v1122
        %v1131 = vadd.f32 %v1130, %v1123
        %v1132 = vadd.f32 %v1131, %v1124
        %v1133 = vadd.f32 %v1132, %v1125
        %v1134 = vadd.f32 %v1133, %v1126
        %v1135 = vrot.slane %v1134, 4
        %v1136 = vadd.f32 %v1134, %v1135
        %v1137 = vrot.slane %v1136, 2
        %v1138 = vadd.f32 %v1136, %v1137
        %v1139 = vrot.slane %v1138, 1
        %v1140 = vadd.f32 %v1138, %v1139
        %v1141 = vadd.f32 %v1127, %v1140
        %1142 = vst [vmem:[#allocation3] sm:$0x1] %v1141
        %v1143 = vld [vmem:[#allocation4] sm:$0x1]
        %v1144 = vmul.f32 %v1119, %v1119
        %v1145 = vmul.f32 %v1120, %v1120
        %v1146 = vmul.f32 %v1121, %v1121
        %v1147 = vmul.f32 %v1122, %v1122
        %v1148 = vmul.f32 %v1123, %v1123
        %v1149 = vmul.f32 %v1124, %v1124
        %v1150 = vmul.f32 %v1125, %v1125
        %v1151 = vmul.f32 %v1126, %v1126
        %v1152 = vadd.f32 %v1144, %v1145
        %v1153 = vadd.f32 %v1152, %v1146
        %v1154 = vadd.f32 %v1153, %v1147
        %v1155 = vadd.f32 %v1154, %v1148
        %v1156 = vadd.f32 %v1155, %v1149
        %v1157 = vadd.f32 %v1156, %v1150
        %v1158 = vadd.f32 %v1157, %v1151
        %v1159 = vrot.slane %v1158, 4
        %v1160 = vadd.f32 %v1158, %v1159
        %v1161 = vrot.slane %v1160, 2
        %v1162 = vadd.f32 %v1160, %v1161
        %v1163 = vrot.slane %v1162, 1
        %v1164 = vadd.f32 %v1162, %v1163
        %v1165 = vadd.f32 %v1143, %v1164
        %1166 = vst [vmem:[#allocation4] sm:$0x1] %v1165
        %v1167 = vpack.c.bf16 %v1120, %v1119
        %v1168 = vpack.c.bf16 %v1122, %v1121
        %v1169 = vpack.c.bf16 %v1124, %v1123
        %v1170 = vpack.c.bf16 %v1126, %v1125
        %v1175 = vunpack.c.l.b16 %v1167
        %v1176 = vunpack.c.h.b16 %v1167
        %v1177 = vunpack.c.l.b16 %v1168
        %v1178 = vunpack.c.h.b16 %v1168
        %v1179 = vunpack.c.l.b16 %v1169
        %v1180 = vunpack.c.h.b16 %v1169
        %v1181 = vunpack.c.l.b16 %v1170
        %v1182 = vunpack.c.h.b16 %v1170
        %v1183 = vpack.c.b16 %v1175, %v1175
        %v1184 = vpack.c.b16 %v1176, %v1176
        %v1185 = vpack.c.b16 %v1177, %v1177
        %v1186 = vpack.c.b16 %v1178, %v1178
        %v1187 = vpack.c.b16 %v1179, %v1179
        %v1188 = vpack.c.b16 %v1180, %v1180
        %v1189 = vpack.c.b16 %v1181, %v1181
        %v1190 = vpack.c.b16 %v1182, %v1182
        %s1199 = smul.u32 %s180, 2
        %s1200 = smul.addr %s1199, 4
        %s1201 = scalar_lea.vmem [#allocation2], %s1200
        %1202 = vst [vmem:[%s1201] sm:$0xf] %v1183
        %1203 = vst [vmem:[%s1201 + $0x4] sm:$0xf] %v1184
        %1204 = vst [vmem:[%s1201 + $0x8] sm:$0xf] %v1185
        %1205 = vst [vmem:[%s1201 + $0xc] sm:$0xf] %v1186
        %1206 = vst [vmem:[%s1201 + $0x10] sm:$0xf] %v1187
        %1207 = vst [vmem:[%s1201 + $0x14] sm:$0xf] %v1188
        %1208 = vst [vmem:[%s1201 + $0x18] sm:$0xf] %v1189
        %1209 = vst [vmem:[%s1201 + $0x1c] sm:$0xf] %v1190
      $region37: #{residual_block.1} parent=31 // loop_footer
        %s179 = sadd.s32 1, %s175
      $region38: #{residual_block.1} parent=31 // loop_footer_branch
        %174 = sbr.rel target = $region34
      $region39: #{residual_block.1} parent=31 // loop_exit
        _
      %v1210 = vld [vmem:[#allocation3] sm:$0x1]
      %v1211 = vmul.f32 %v1210, 0.00390625
      %v1212 = vld [vmem:[#allocation4] sm:$0x1]
      %v1213 = vmul.f32 %v1212, 0.00390625
      %v1214 = vmul.f32 %v1211, %v1211
      %v1215 = vsub.f32 %v1213, %v1214
      %v1216 = vmax.f32 %v1215, 0.0
      %v1217 = vadd.f32 %v1216, 1e-05
      %v1218 = vrsqrt.pop %v1217
      %1219 = vst [vmem:[#allocation3] sm:$0x1] 0.0
      %1220 = vst [vmem:[#allocation4] sm:$0x1] 0.0
      loop: start=0, step=1, limit=4
      $region40: #{residual_block.1} parent=31 // loop_pre_header
        _
      $region41: #{residual_block.1} parent=31 // loop_header
        %s1222 = sphi 0, %s1226
        %p1223 = scmp.ge.s32.totalorder %s1222, 4
      $region42: #{residual_block.1} parent=31 // loop_header_branch
        %1225 = sbr.rel (%p1223) target = $region46
      $region43: #{residual_block.1} parent=31 // loop_body
        %s1227 = smul.u32 %s1222, 4
        %p1228 = scmp.eq.s32.totalorder %s1227, 0
        %s1229 = ssub.s32 %s1227, 1
        %s1230 = scalar_select %p1228, 1, %s1229
        %s1231 = sadd.s32 %s1227, 4
        %p1232 = scmp.ge.s32.totalorder %s1231, 16
        %s1233 = scalar_select %p1232, 14, %s1231
        %s1234 = smul.u32 %s1230, 2
        %s1235 = smul.addr %s1234, 4
        %s1236 = scalar_lea.vmem [#allocation2], %s1235
        %v1237 = vld [vmem:[%s1236] sm:$0xf]
        %v1238 = vld [vmem:[%s1236 + $0x4] sm:$0xf]
        %s1239 = smul.u32 %s1227, 2
        %s1240 = smul.addr %s1239, 4
        %s1241 = scalar_lea.vmem [#allocation2], %s1240
        %v1242 = vld [vmem:[%s1241] sm:$0xf]
        %v1243 = vld [vmem:[%s1241 + $0x4] sm:$0xf]
        %v1244 = vld [vmem:[%s1241 + $0x8] sm:$0xf]
        %v1245 = vld [vmem:[%s1241 + $0xc] sm:$0xf]
        %v1246 = vld [vmem:[%s1241 + $0x10] sm:$0xf]
        %v1247 = vld [vmem:[%s1241 + $0x14] sm:$0xf]
        %v1248 = vld [vmem:[%s1241 + $0x18] sm:$0xf]
        %v1249 = vld [vmem:[%s1241 + $0x1c] sm:$0xf]
        %s1250 = smul.u32 %s1233, 2
        %s1251 = smul.addr %s1250, 4
        %s1252 = scalar_lea.vmem [#allocation2], %s1251
        %v1253 = vld [vmem:[%s1252] sm:$0xf]
        %v1254 = vld [vmem:[%s1252 + $0x4] sm:$0xf]
        %v1255 = vunpack.c.l.bf16 %v1237
        %v1256 = vunpack.c.l.bf16 %v1238
        %v1257 = vunpack.c.l.bf16 %v1242
        %v1258 = vunpack.c.l.bf16 %v1243
        %v1259 = vunpack.c.l.bf16 %v1244
        %v1260 = vunpack.c.l.bf16 %v1245
        %v1261 = vunpack.c.l.bf16 %v1246
        %v1262 = vunpack.c.l.bf16 %v1247
        %v1263 = vunpack.c.l.bf16 %v1248
        %v1264 = vunpack.c.l.bf16 %v1249
        %v1265 = vunpack.c.l.bf16 %v1253
        %v1266 = vunpack.c.l.bf16 %v1254
        %v1268 = vlaneseq
        %v1269 = vshrl.u32 %v1268, 7
        %v1270 = vsub.s32 0, %v1269
        %v1271 = vrot.slane %v1211, %v1270
        %v1273 = vsub.f32 %v1255, %v1271
        %v1274 = vsub.f32 %v1256, %v1271
        %v1275 = vsub.f32 %v1257, %v1271
        %v1276 = vsub.f32 %v1258, %v1271
        %v1277 = vsub.f32 %v1259, %v1271
        %v1278 = vsub.f32 %v1260, %v1271
        %v1279 = vsub.f32 %v1261, %v1271
        %v1280 = vsub.f32 %v1262, %v1271
        %v1281 = vsub.f32 %v1263, %v1271
        %v1282 = vsub.f32 %v1264, %v1271
        %v1283 = vsub.f32 %v1265, %v1271
        %v1284 = vsub.f32 %v1266, %v1271
        %v1286 = vlaneseq
        %v1287 = vshrl.u32 %v1286, 7
        %v1288 = vsub.s32 0, %v1287
        %v1289 = vrot.slane %v1218, %v1288
        %v1291 = vmul.f32 %v1273, %v1289
        %v1292 = vmul.f32 %v1274, %v1289
        %v1293 = vmul.f32 %v1275, %v1289
        %v1294 = vmul.f32 %v1276, %v1289
        %v1295 = vmul.f32 %v1277, %v1289
        %v1296 = vmul.f32 %v1278, %v1289
        %v1297 = vmul.f32 %v1279, %v1289
        %v1298 = vmul.f32 %v1280, %v1289
        %v1299 = vmul.f32 %v1281, %v1289
        %v1300 = vmul.f32 %v1282, %v1289
        %v1301 = vmul.f32 %v1283, %v1289
        %v1302 = vmul.f32 %v1284, %v1289
        %v1303 = vmax.f32 %v1291, 0.0
        %v1304 = vmax.f32 %v1292, 0.0
        %v1305 = vmax.f32 %v1293, 0.0
        %v1306 = vmax.f32 %v1294, 0.0
        %v1307 = vmax.f32 %v1295, 0.0
        %v1308 = vmax.f32 %v1296, 0.0
        %v1309 = vmax.f32 %v1297, 0.0
        %v1310 = vmax.f32 %v1298, 0.0
        %v1311 = vmax.f32 %v1299, 0.0
        %v1312 = vmax.f32 %v1300, 0.0
        %v1313 = vmax.f32 %v1301, 0.0
        %v1314 = vmax.f32 %v1302, 0.0
        %v1315 = vpack.c.bf16 %v1304, %v1303
        %v1316 = vpack.c.bf16 %v1306, %v1305
        %v1317 = vpack.c.bf16 %v1308, %v1307
        %v1318 = vpack.c.bf16 %v1310, %v1309
        %v1319 = vpack.c.bf16 %v1312, %v1311
        %v1320 = vpack.c.bf16 %v1314, %v1313
        %v1322 = vshrl.u32 %v1315, 16
        %v1325 = vshrl.u32 %v1316, 16
        %v1328 = vshrl.u32 %v1317, 16
        %v1331 = vshrl.u32 %v1318, 16
        %v1334 = vshrl.u32 %v1319, 16
        %v1337 = vshrl.u32 %v1320, 16
        %v1345 = vrot.slane %v1322, 7
        %v1346 = vshll.u32 %v1315, 16
        %v1348 = vor.u32 %v1345, %v1346
        %v1349 = vrot.slane %v1325, 7
        %v1350 = vshll.u32 %v1316, 16
        %v1352 = vor.u32 %v1349, %v1350
        %v1353 = vrot.slane %v1328, 7
        %v1354 = vshll.u32 %v1317, 16
        %v1356 = vor.u32 %v1353, %v1354
        %v1357 = vrot.slane %v1331, 7
        %v1358 = vshll.u32 %v1318, 16
        %v1360 = vor.u32 %v1357, %v1358
        %v1361 = vrot.slane %v1334, 7
        %v1362 = vshll.u32 %v1319, 16
        %v1364 = vor.u32 %v1361, %v1362
        %v1365 = vrot.slane %v1337, 7
        %v1366 = vshll.u32 %v1320, 16
        %v1368 = vor.u32 %v1365, %v1366
        %vm1375 = vcmask 1040384
        %vm1376 = vsmask.f32 256
        %vm1377 = vmand %vm1375, %vm1376
        %v1378 = vsel %vm1377, %v1322, %v1348
        %v1379 = vsel %vm1377, %v1325, %v1352
        %v1380 = vsel %vm1377, %v1328, %v1356
        %v1381 = vsel %vm1377, %v1331, %v1360
        %v1382 = vsel %vm1377, %v1334, %v1364
        %v1383 = vsel %vm1377, %v1337, %v1368
        %v1384 = vrot.slane %v1346, 1
        %v1385 = vor.u32 %v1322, %v1384
        %v1386 = vrot.slane %v1350, 1
        %v1387 = vor.u32 %v1325, %v1386
        %v1388 = vrot.slane %v1354, 1
        %v1389 = vor.u32 %v1328, %v1388
        %v1390 = vrot.slane %v1358, 1
        %v1391 = vor.u32 %v1331, %v1390
        %v1392 = vrot.slane %v1362, 1
        %v1393 = vor.u32 %v1334, %v1392
        %v1394 = vrot.slane %v1366, 1
        %v1395 = vor.u32 %v1337, %v1394
        %vm1408 = vcmask 1047552
        %vm1409 = vsmask.f32 7424
        %vm1410 = vmand %vm1408, %vm1409
        %v1411 = vsel %vm1410, %v1385, %v1346
        %v1412 = vsel %vm1410, %v1387, %v1350
        %v1413 = vsel %vm1410, %v1389, %v1354
        %v1414 = vsel %vm1410, %v1391, %v1358
        %v1415 = vsel %vm1410, %v1393, %v1362
        %v1416 = vsel %vm1410, %v1395, %v1366
        %v1417 = vld [vmem:[%s2] sm:$0xff]
        %v1418 = vld [vmem:[%s2 + $0x8] sm:$0xf]
        %v1419 = vld [vmem:[%s2 + $0xc] sm:$0xff]
        %v1420 = vld [vmem:[%s2 + $0x14] sm:$0xf]
        %v1421 = vld [vmem:[%s2 + $0x18] sm:$0xff]
        %v1422 = vld [vmem:[%s2 + $0x20] sm:$0xf]
        %v1423 = vld [vmem:[%s2 + $0x24] sm:$0xff]
        %v1424 = vld [vmem:[%s2 + $0x2c] sm:$0xf]
        %v1425 = vld [vmem:[%s2 + $0x30] sm:$0xff]
        %v1426 = vld [vmem:[%s2 + $0x38] sm:$0xf]
        %v1427 = vld [vmem:[%s2 + $0x3c] sm:$0xff]
        %v1428 = vld [vmem:[%s2 + $0x44] sm:$0xf]
        %v1429 = vld [vmem:[%s2 + $0x48] sm:$0xff]
        %v1430 = vld [vmem:[%s2 + $0x50] sm:$0xf]
        %v1431 = vld [vmem:[%s2 + $0x54] sm:$0xff]
        %v1432 = vld [vmem:[%s2 + $0x5c] sm:$0xf]
        %v1433 = vld [vmem:[%s2 + $0x60] sm:$0xff]
        %v1434 = vld [vmem:[%s2 + $0x68] sm:$0xf]
        %v1435 = vld [vmem:[%s2 + $0x6c] sm:$0xff]
        %v1436 = vld [vmem:[%s2 + $0x74] sm:$0xf]
        %v1437 = vld [vmem:[%s2 + $0x78] sm:$0xff]
        %v1438 = vld [vmem:[%s2 + $0x80] sm:$0xf]
        %v1439 = vld [vmem:[%s2 + $0x84] sm:$0xff]
        %v1440 = vld [vmem:[%s2 + $0x8c] sm:$0xf]
        %v1441 = vld [vmem:[%s2 + $0x90] sm:$0xff]
        %v1442 = vld [vmem:[%s2 + $0x98] sm:$0xf]
        %v1443 = vld [vmem:[%s2 + $0x9c] sm:$0xff]
        %v1444 = vld [vmem:[%s2 + $0xa4] sm:$0xf]
        %v1445 = vld [vmem:[%s2 + $0xa8] sm:$0xff]
        %v1446 = vld [vmem:[%s2 + $0xb0] sm:$0xf]
        %v1447 = vld [vmem:[%s2 + $0xb4] sm:$0xff]
        %v1448 = vld [vmem:[%s2 + $0xbc] sm:$0xf]
        %v1449 = vld [vmem:[%s2 + $0xc0] sm:$0xff]
        %v1450 = vld [vmem:[%s2 + $0xc8] sm:$0xf]
        %v1451 = vld [vmem:[%s2 + $0xcc] sm:$0xff]
        %v1452 = vld [vmem:[%s2 + $0xd4] sm:$0xf]
        %v1453 = vld [vmem:[%s2 + $0xd8] sm:$0xff]
        %v1454 = vld [vmem:[%s2 + $0xe0] sm:$0xf]
        %v1455 = vld [vmem:[%s2 + $0xe4] sm:$0xff]
        %v1456 = vld [vmem:[%s2 + $0xec] sm:$0xf]
        %v1457 = vld [vmem:[%s2 + $0xf0] sm:$0xff]
        %v1458 = vld [vmem:[%s2 + $0xf8] sm:$0xf]
        %v1459 = vld [vmem:[%s2 + $0xfc] sm:$0xff]
        %v1460 = vld [vmem:[%s2 + $0x104] sm:$0xf]
        %v1461 = vld [vmem:[%s2 + $0x108] sm:$0xff]
        %v1462 = vld [vmem:[%s2 + $0x110] sm:$0xf]
        %v1463 = vld [vmem:[%s2 + $0x114] sm:$0xff]
        %v1464 = vld [vmem:[%s2 + $0x11c] sm:$0xf]
        %v1465 = vld [vmem:[%s2 + $0x120] sm:$0xff]
        %v1466 = vld [vmem:[%s2 + $0x128] sm:$0xf]
        %v1467 = vld [vmem:[%s2 + $0x12c] sm:$0xff]
        %v1468 = vld [vmem:[%s2 + $0x134] sm:$0xf]
        %v1469 = vld [vmem:[%s2 + $0x138] sm:$0xff]
        %v1470 = vld [vmem:[%s2 + $0x140] sm:$0xf]
        %v1471 = vld [vmem:[%s2 + $0x144] sm:$0xff]
        %v1472 = vld [vmem:[%s2 + $0x14c] sm:$0xf]
        %v1473 = vld [vmem:[%s2 + $0x150] sm:$0xff]
        %v1474 = vld [vmem:[%s2 + $0x158] sm:$0xf]
        %v1475 = vld [vmem:[%s2 + $0x15c] sm:$0xff]
        %v1476 = vld [vmem:[%s2 + $0x164] sm:$0xf]
        %v1477 = vld [vmem:[%s2 + $0x168] sm:$0xff]
        %v1478 = vld [vmem:[%s2 + $0x170] sm:$0xf]
        %v1479 = vld [vmem:[%s2 + $0x174] sm:$0xff]
        %v1480 = vld [vmem:[%s2 + $0x17c] sm:$0xf]
        %v1481 = vld [vmem:[%s2 + $0x180] sm:$0xff]
        %v1482 = vld [vmem:[%s2 + $0x188] sm:$0xf]
        %v1483 = vld [vmem:[%s2 + $0x18c] sm:$0xff]
        %v1484 = vld [vmem:[%s2 + $0x194] sm:$0xf]
        %v1485 = vld [vmem:[%s2 + $0x198] sm:$0xff]
        %v1486 = vld [vmem:[%s2 + $0x1a0] sm:$0xf]
        %v1487 = vld [vmem:[%s2 + $0x1a4] sm:$0xff]
        %v1488 = vld [vmem:[%s2 + $0x1ac] sm:$0xf]
        %v1489 = vld [vmem:[%s2 + $0x1b0] sm:$0xff]
        %v1490 = vld [vmem:[%s2 + $0x1b8] sm:$0xf]
        %v1491 = vld [vmem:[%s2 + $0x1bc] sm:$0xff]
        %v1492 = vld [vmem:[%s2 + $0x1c4] sm:$0xf]
        %v1493 = vld [vmem:[%s2 + $0x1c8] sm:$0xff]
        %v1494 = vld [vmem:[%s2 + $0x1d0] sm:$0xf]
        %v1495 = vld [vmem:[%s2 + $0x1d4] sm:$0xff]
        %v1496 = vld [vmem:[%s2 + $0x1dc] sm:$0xf]
        %v1497 = vld [vmem:[%s2 + $0x1e0] sm:$0xff]
        %v1498 = vld [vmem:[%s2 + $0x1e8] sm:$0xf]
        %v1499 = vld [vmem:[%s2 + $0x1ec] sm:$0xff]
        %v1500 = vld [vmem:[%s2 + $0x1f4] sm:$0xf]
        %v1501 = vld [vmem:[%s2 + $0x1f8] sm:$0xff]
        %v1502 = vld [vmem:[%s2 + $0x200] sm:$0xf]
        %v1503 = vld [vmem:[%s2 + $0x204] sm:$0xff]
        %v1504 = vld [vmem:[%s2 + $0x20c] sm:$0xf]
        %v1505 = vld [vmem:[%s2 + $0x210] sm:$0xff]
        %v1506 = vld [vmem:[%s2 + $0x218] sm:$0xf]
        %v1507 = vld [vmem:[%s2 + $0x21c] sm:$0xff]
        %v1508 = vld [vmem:[%s2 + $0x224] sm:$0xf]
        %v1509 = vld [vmem:[%s2 + $0x228] sm:$0xff]
        %v1510 = vld [vmem:[%s2 + $0x230] sm:$0xf]
        %v1511 = vld [vmem:[%s2 + $0x234] sm:$0xff]
        %v1512 = vld [vmem:[%s2 + $0x23c] sm:$0xf]
        %v1609 = vunpack.c.l.b16 %v1417
        %v1610 = vunpack.c.h.b16 %v1417
        %v1611 = vunpack.c.l.b16 %v1418
        %v1612 = vunpack.c.l.b16 %v1419
        %v1613 = vunpack.c.h.b16 %v1419
        %v1614 = vunpack.c.l.b16 %v1420
        %v1615 = vunpack.c.l.b16 %v1421
        %v1616 = vunpack.c.h.b16 %v1421
        %v1617 = vunpack.c.l.b16 %v1422
        %v1618 = vunpack.c.l.b16 %v1423
        %v1619 = vunpack.c.h.b16 %v1423
        %v1620 = vunpack.c.l.b16 %v1424
        %v1621 = vunpack.c.l.b16 %v1425
        %v1622 = vunpack.c.h.b16 %v1425
        %v1623 = vunpack.c.l.b16 %v1426
        %v1624 = vunpack.c.l.b16 %v1427
        %v1625 = vunpack.c.h.b16 %v1427
        %v1626 = vunpack.c.l.b16 %v1428
        %v1627 = vunpack.c.l.b16 %v1429
        %v1628 = vunpack.c.h.b16 %v1429
        %v1629 = vunpack.c.l.b16 %v1430
        %v1630 = vunpack.c.l.b16 %v1431
        %v1631 = vunpack.c.h.b16 %v1431
        %v1632 = vunpack.c.l.b16 %v1432
        %v1633 = vunpack.c.l.b16 %v1433
        %v1634 = vunpack.c.h.b16 %v1433
        %v1635 = vunpack.c.l.b16 %v1434
        %v1636 = vunpack.c.l.b16 %v1435
        %v1637 = vunpack.c.h.b16 %v1435
        %v1638 = vunpack.c.l.b16 %v1436
        %v1639 = vunpack.c.l.b16 %v1437
        %v1640 = vunpack.c.h.b16 %v1437
        %v1641 = vunpack.c.l.b16 %v1438
        %v1642 = vunpack.c.l.b16 %v1439
        %v1643 = vunpack.c.h.b16 %v1439
        %v1644 = vunpack.c.l.b16 %v1440
        %v1645 = vunpack.c.l.b16 %v1441
        %v1646 = vunpack.c.h.b16 %v1441
        %v1647 = vunpack.c.l.b16 %v1442
        %v1648 = vunpack.c.l.b16 %v1443
        %v1649 = vunpack.c.h.b16 %v1443
        %v1650 = vunpack.c.l.b16 %v1444
        %v1651 = vunpack.c.l.b16 %v1445
        %v1652 = vunpack.c.h.b16 %v1445
        %v1653 = vunpack.c.l.b16 %v1446
        %v1654 = vunpack.c.l.b16 %v1447
        %v1655 = vunpack.c.h.b16 %v1447
        %v1656 = vunpack.c.l.b16 %v1448
        %v1657 = vunpack.c.l.b16 %v1449
        %v1658 = vunpack.c.h.b16 %v1449
        %v1659 = vunpack.c.l.b16 %v1450
        %v1660 = vunpack.c.l.b16 %v1451
        %v1661 = vunpack.c.h.b16 %v1451
        %v1662 = vunpack.c.l.b16 %v1452
        %v1663 = vunpack.c.l.b16 %v1453
        %v1664 = vunpack.c.h.b16 %v1453
        %v1665 = vunpack.c.l.b16 %v1454
        %v1666 = vunpack.c.l.b16 %v1455
        %v1667 = vunpack.c.h.b16 %v1455
        %v1668 = vunpack.c.l.b16 %v1456
        %v1669 = vunpack.c.l.b16 %v1457
        %v1670 = vunpack.c.h.b16 %v1457
        %v1671 = vunpack.c.l.b16 %v1458
        %v1672 = vunpack.c.l.b16 %v1459
        %v1673 = vunpack.c.h.b16 %v1459
        %v1674 = vunpack.c.l.b16 %v1460
        %v1675 = vunpack.c.l.b16 %v1461
        %v1676 = vunpack.c.h.b16 %v1461
        %v1677 = vunpack.c.l.b16 %v1462
        %v1678 = vunpack.c.l.b16 %v1463
        %v1679 = vunpack.c.h.b16 %v1463
        %v1680 = vunpack.c.l.b16 %v1464
        %v1681 = vunpack.c.l.b16 %v1465
        %v1682 = vunpack.c.h.b16 %v1465
        %v1683 = vunpack.c.l.b16 %v1466
        %v1684 = vunpack.c.l.b16 %v1467
        %v1685 = vunpack.c.h.b16 %v1467
        %v1686 = vunpack.c.l.b16 %v1468
        %v1687 = vunpack.c.l.b16 %v1469
        %v1688 = vunpack.c.h.b16 %v1469
        %v1689 = vunpack.c.l.b16 %v1470
        %v1690 = vunpack.c.l.b16 %v1471
        %v1691 = vunpack.c.h.b16 %v1471
        %v1692 = vunpack.c.l.b16 %v1472
        %v1693 = vunpack.c.l.b16 %v1473
        %v1694 = vunpack.c.h.b16 %v1473
        %v1695 = vunpack.c.l.b16 %v1474
        %v1696 = vunpack.c.l.b16 %v1475
        %v1697 = vunpack.c.h.b16 %v1475
        %v1698 = vunpack.c.l.b16 %v1476
        %v1699 = vunpack.c.l.b16 %v1477
        %v1700 = vunpack.c.h.b16 %v1477
        %v1701 = vunpack.c.l.b16 %v1478
        %v1702 = vunpack.c.l.b16 %v1479
        %v1703 = vunpack.c.h.b16 %v1479
        %v1704 = vunpack.c.l.b16 %v1480
        %v1705 = vunpack.c.l.b16 %v1481
        %v1706 = vunpack.c.h.b16 %v1481
        %v1707 = vunpack.c.l.b16 %v1482
        %v1708 = vunpack.c.l.b16 %v1483
        %v1709 = vunpack.c.h.b16 %v1483
        %v1710 = vunpack.c.l.b16 %v1484
        %v1711 = vunpack.c.l.b16 %v1485
        %v1712 = vunpack.c.h.b16 %v1485
        %v1713 = vunpack.c.l.b16 %v1486
        %v1714 = vunpack.c.l.b16 %v1487
        %v1715 = vunpack.c.h.b16 %v1487
        %v1716 = vunpack.c.l.b16 %v1488
        %v1717 = vunpack.c.l.b16 %v1489
        %v1718 = vunpack.c.h.b16 %v1489
        %v1719 = vunpack.c.l.b16 %v1490
        %v1720 = vunpack.c.l.b16 %v1491
        %v1721 = vunpack.c.h.b16 %v1491
        %v1722 = vunpack.c.l.b16 %v1492
        %v1723 = vunpack.c.l.b16 %v1493
        %v1724 = vunpack.c.h.b16 %v1493
        %v1725 = vunpack.c.l.b16 %v1494
        %v1726 = vunpack.c.l.b16 %v1495
        %v1727 = vunpack.c.h.b16 %v1495
        %v1728 = vunpack.c.l.b16 %v1496
        %v1729 = vunpack.c.l.b16 %v1497
        %v1730 = vunpack.c.h.b16 %v1497
        %v1731 = vunpack.c.l.b16 %v1498
        %v1732 = vunpack.c.l.b16 %v1499
        %v1733 = vunpack.c.h.b16 %v1499
        %v1734 = vunpack.c.l.b16 %v1500
        %v1735 = vunpack.c.l.b16 %v1501
        %v1736 = vunpack.c.h.b16 %v1501
        %v1737 = vunpack.c.l.b16 %v1502
        %v1738 = vunpack.c.l.b16 %v1503
        %v1739 = vunpack.c.h.b16 %v1503
        %v1740 = vunpack.c.l.b16 %v1504
        %v1741 = vunpack.c.l.b16 %v1505
        %v1742 = vunpack.c.h.b16 %v1505
        %v1743 = vunpack.c.l.b16 %v1506
        %v1744 = vunpack.c.l.b16 %v1507
        %v1745 = vunpack.c.h.b16 %v1507
        %v1746 = vunpack.c.l.b16 %v1508
        %v1747 = vunpack.c.l.b16 %v1509
        %v1748 = vunpack.c.h.b16 %v1509
        %v1749 = vunpack.c.l.b16 %v1510
        %v1750 = vunpack.c.l.b16 %v1511
        %v1751 = vunpack.c.h.b16 %v1511
        %v1752 = vunpack.c.l.b16 %v1512
        %v1753 = vpack.c.b16 %v1612, %v1609
        %v1754 = vpack.c.b16 %v1613, %v1610
        %v1755 = vpack.c.b16 %v1614, %v1611
        %v1756 = vpack.c.b16 %v1618, %v1615
        %v1757 = vpack.c.b16 %v1619, %v1616
        %v1758 = vpack.c.b16 %v1620, %v1617
        %v1759 = vpack.c.b16 %v1624, %v1621
        %v1760 = vpack.c.b16 %v1625, %v1622
        %v1761 = vpack.c.b16 %v1626, %v1623
        %v1762 = vpack.c.b16 %v1630, %v1627
        %v1763 = vpack.c.b16 %v1631, %v1628
        %v1764 = vpack.c.b16 %v1632, %v1629
        %v1765 = vpack.c.b16 %v1636, %v1633
        %v1766 = vpack.c.b16 %v1637, %v1634
        %v1767 = vpack.c.b16 %v1638, %v1635
        %v1768 = vpack.c.b16 %v1642, %v1639
        %v1769 = vpack.c.b16 %v1643, %v1640
        %v1770 = vpack.c.b16 %v1644, %v1641
        %v1771 = vpack.c.b16 %v1648, %v1645
        %v1772 = vpack.c.b16 %v1649, %v1646
        %v1773 = vpack.c.b16 %v1650, %v1647
        %v1774 = vpack.c.b16 %v1654, %v1651
        %v1775 = vpack.c.b16 %v1655, %v1652
        %v1776 = vpack.c.b16 %v1656, %v1653
        %v1777 = vpack.c.b16 %v1660, %v1657
        %v1778 = vpack.c.b16 %v1661, %v1658
        %v1779 = vpack.c.b16 %v1662, %v1659
        %v1780 = vpack.c.b16 %v1666, %v1663
        %v1781 = vpack.c.b16 %v1667, %v1664
        %v1782 = vpack.c.b16 %v1668, %v1665
        %v1783 = vpack.c.b16 %v1672, %v1669
        %v1784 = vpack.c.b16 %v1673, %v1670
        %v1785 = vpack.c.b16 %v1674, %v1671
        %v1786 = vpack.c.b16 %v1678, %v1675
        %v1787 = vpack.c.b16 %v1679, %v1676
        %v1788 = vpack.c.b16 %v1680, %v1677
        %v1789 = vpack.c.b16 %v1684, %v1681
        %v1790 = vpack.c.b16 %v1685, %v1682
        %v1791 = vpack.c.b16 %v1686, %v1683
        %v1792 = vpack.c.b16 %v1690, %v1687
        %v1793 = vpack.c.b16 %v1691, %v1688
        %v1794 = vpack.c.b16 %v1692, %v1689
        %v1795 = vpack.c.b16 %v1696, %v1693
        %v1796 = vpack.c.b16 %v1697, %v1694
        %v1797 = vpack.c.b16 %v1698, %v1695
        %v1798 = vpack.c.b16 %v1702, %v1699
        %v1799 = vpack.c.b16 %v1703, %v1700
        %v1800 = vpack.c.b16 %v1704, %v1701
        %v1801 = vpack.c.b16 %v1708, %v1705
        %v1802 = vpack.c.b16 %v1709, %v1706
        %v1803 = vpack.c.b16 %v1710, %v1707
        %v1804 = vpack.c.b16 %v1714, %v1711
        %v1805 = vpack.c.b16 %v1715, %v1712
        %v1806 = vpack.c.b16 %v1716, %v1713
        %v1807 = vpack.c.b16 %v1720, %v1717
        %v1808 = vpack.c.b16 %v1721, %v1718
        %v1809 = vpack.c.b16 %v1722, %v1719
        %v1810 = vpack.c.b16 %v1726, %v1723
        %v1811 = vpack.c.b16 %v1727, %v1724
        %v1812 = vpack.c.b16 %v1728, %v1725
        %v1813 = vpack.c.b16 %v1732, %v1729
        %v1814 = vpack.c.b16 %v1733, %v1730
        %v1815 = vpack.c.b16 %v1734, %v1731
        %v1816 = vpack.c.b16 %v1738, %v1735
        %v1817 = vpack.c.b16 %v1739, %v1736
        %v1818 = vpack.c.b16 %v1740, %v1737
        %v1819 = vpack.c.b16 %v1744, %v1741
        %v1820 = vpack.c.b16 %v1745, %v1742
        %v1821 = vpack.c.b16 %v1746, %v1743
        %v1822 = vpack.c.b16 %v1750, %v1747
        %v1823 = vpack.c.b16 %v1751, %v1748
        %v1824 = vpack.c.b16 %v1752, %v1749
        %1897 = vmatprep.subr.bf16.mxu0 %v1775
        %1898 = vmatpush1.bf16.msra.mxu0 %v1774
        %1899 = vmatprep.subr.bf16.mxu0 %v1772
        %1900 = vmatpush1.bf16.msra.mxu0 %v1771
        %1901 = vmatprep.subr.bf16.mxu0 %v1769
        %1902 = vmatpush1.bf16.msra.mxu0 %v1768
        %1903 = vmatprep.subr.bf16.mxu0 %v1766
        %1904 = vmatpush1.bf16.msra.mxu0 %v1765
        %1905 = vmatprep.subr.bf16.mxu0 %v1763
        %1906 = vmatpush1.bf16.msra.mxu0 %v1762
        %1907 = vmatprep.subr.bf16.mxu0 %v1760
        %1908 = vmatpush1.bf16.msra.mxu0 %v1759
        %1909 = vmatprep.subr.bf16.mxu0 %v1757
        %1910 = vmatpush1.bf16.msra.mxu0 %v1756
        %1911 = vmatprep.subr.bf16.mxu0 %v1754
        %1912 = vmatpush1.bf16.msra.mxu0 %v1753
        %1913 = vmatprep.subr.bf16.mxu0 %v1799
        %1914 = vmatpush2.bf16.msra.mxu0 %v1798
        %1915 = vmatprep.subr.bf16.mxu0 %v1796
        %1916 = vmatpush2.bf16.msra.mxu0 %v1795
        %1917 = vmatprep.subr.bf16.mxu0 %v1793
        %1918 = vmatpush2.bf16.msra.mxu0 %v1792
        %1919 = vmatprep.subr.bf16.mxu0 %v1790
        %1920 = vmatpush2.bf16.msra.mxu0 %v1789
        %1921 = vmatprep.subr.bf16.mxu0 %v1787
        %1922 = vmatpush2.bf16.msra.mxu0 %v1786
        %1923 = vmatprep.subr.bf16.mxu0 %v1784
        %1924 = vmatpush2.bf16.msra.mxu0 %v1783
        %1925 = vmatprep.subr.bf16.mxu0 %v1781
        %1926 = vmatpush2.bf16.msra.mxu0 %v1780
        %1927 = vmatprep.subr.bf16.mxu0 %v1778
        %1928 = vmatpush2.bf16.msra.mxu0 %v1777
        %1929 = vmatprep.mubr.bf16.mxu0 %v1315
        %1930 = vmatmul.mubr.bf16.gmra.mxu0 %v1378
        %v1931 = vpop.f32.mrf.mxu0
        %v1932 = vadd.f32 0.0, %v1931
        %v1933 = vpop.f32.mrf.mxu0
        %v1934 = vpop.f32.mrf.mxu0
        %v1935 = vadd.f32 0.0, %v1934
        %v1936 = vpop.f32.mrf.mxu0
        %1937 = vmatprep.mubr.bf16.mxu0 %v1316
        %1938 = vmatmul.mubr.bf16.gmra.mxu0 %v1379
        %v1939 = vpop.f32.mrf.mxu0
        %v1940 = vadd.f32 0.0, %v1939
        %v1941 = vpop.f32.mrf.mxu0
        %v1942 = vadd.f32 0.0, %v1941
        %v1943 = vpop.f32.mrf.mxu0
        %v1944 = vadd.f32 0.0, %v1943
        %v1945 = vpop.f32.mrf.mxu0
        %v1946 = vadd.f32 0.0, %v1945
        %1947 = vmatprep.mubr.bf16.mxu0 %v1317
        %1948 = vmatmul.mubr.bf16.gmra.mxu0 %v1380
        %v1949 = vpop.f32.mrf.mxu0
        %v1950 = vadd.f32 0.0, %v1949
        %v1951 = vpop.f32.mrf.mxu0
        %v1952 = vadd.f32 0.0, %v1951
        %v1953 = vpop.f32.mrf.mxu0
        %v1954 = vadd.f32 0.0, %v1953
        %v1955 = vpop.f32.mrf.mxu0
        %v1956 = vadd.f32 0.0, %v1955
        %1957 = vmatprep.mubr.bf16.mxu0 %v1318
        %1958 = vmatmul.mubr.bf16.gmra.mxu0 %v1381
        %v1959 = vpop.f32.mrf.mxu0
        %v1960 = vadd.f32 0.0, %v1959
        %v1961 = vpop.f32.mrf.mxu0
        %v1962 = vadd.f32 0.0, %v1961
        %v1963 = vpop.f32.mrf.mxu0
        %v1964 = vadd.f32 0.0, %v1963
        %v1965 = vpop.f32.mrf.mxu0
        %v1966 = vadd.f32 0.0, %v1965
        %1967 = vmatprep.mubr.bf16.mxu0 %v1319
        %1968 = vmatmul.mubr.bf16.gmra.mxu0 %v1382
        %v1969 = vpop.f32.mrf.mxu0
        %v1970 = vpop.f32.mrf.mxu0
        %v1971 = vadd.f32 0.0, %v1970
        %v1972 = vpop.f32.mrf.mxu0
        %v1973 = vpop.f32.mrf.mxu0
        %v1974 = vadd.f32 0.0, %v1973
        %1975 = vmatprep.mubr.bf16.mxu0 %v1320
        %1976 = vmatmul.mubr.bf16.gmra.mxu0 %v1383
        %v1977 = vpop.f32.mrf.mxu0
        %v1978 = vpop.f32.mrf.mxu0
        %v1979 = vpop.f32.mrf.mxu0
        %v1980 = vpop.f32.mrf.mxu0
        %1981 = vdwg.mxu0
        %1982 = vmatprep.subr.bf16.mxu0 %v1823
        %1983 = vmatpush1.bf16.msra.mxu0 %v1822
        %1984 = vmatprep.subr.bf16.mxu0 %v1820
        %1985 = vmatpush1.bf16.msra.mxu0 %v1819
        %1986 = vmatprep.subr.bf16.mxu0 %v1817
        %1987 = vmatpush1.bf16.msra.mxu0 %v1816
        %1988 = vmatprep.subr.bf16.mxu0 %v1814
        %1989 = vmatpush1.bf16.msra.mxu0 %v1813
        %1990 = vmatprep.subr.bf16.mxu0 %v1811
        %1991 = vmatpush1.bf16.msra.mxu0 %v1810
        %1992 = vmatprep.subr.bf16.mxu0 %v1808
        %1993 = vmatpush1.bf16.msra.mxu0 %v1807
        %1994 = vmatprep.subr.bf16.mxu0 %v1805
        %1995 = vmatpush1.bf16.msra.mxu0 %v1804
        %1996 = vmatprep.subr.bf16.mxu0 %v1802
        %1997 = vmatpush1.bf16.msra.mxu0 %v1801
        %1998 = vmatprep.subr.bf16.mxu0 0
        %1999 = vmatpush2.bf16.msra.mxu0 0
        %2000 = vmatprep.subr.bf16.mxu0 0
        %2001 = vmatpush2.bf16.msra.mxu0 0
        %2002 = vmatprep.subr.bf16.mxu0 0
        %2003 = vmatpush2.bf16.msra.mxu0 0
        %2004 = vmatprep.subr.bf16.mxu0 0
        %2005 = vmatpush2.bf16.msra.mxu0 0
        %2006 = vmatprep.subr.bf16.mxu0 0
        %2007 = vmatpush2.bf16.msra.mxu0 0
        %2008 = vmatprep.subr.bf16.mxu0 0
        %2009 = vmatpush2.bf16.msra.mxu0 0
        %2010 = vmatprep.subr.bf16.mxu0 0
        %2011 = vmatpush2.bf16.msra.mxu0 0
        %2012 = vmatprep.subr.bf16.mxu0 0
        %2013 = vmatpush2.bf16.msra.mxu0 0
        %2014 = vmatprep.mubr.bf16.mxu0 0
        %2015 = vmatmul.mubr.bf16.gmra.mxu0 %v1411
        %v2016 = vpop.f32.mrf.mxu0
        %v2017 = vadd.f32 %v1932, %v2016
        %v2018 = vpop.f32.mrf.mxu0
        %v2019 = vpop.f32.mrf.mxu0
        %v2020 = vadd.f32 %v1935, %v2019
        %v2021 = vpop.f32.mrf.mxu0
        %2022 = vmatprep.mubr.bf16.mxu0 0
        %2023 = vmatmul.mubr.bf16.gmra.mxu0 %v1412
        %v2024 = vpop.f32.mrf.mxu0
        %v2025 = vadd.f32 %v1940, %v2024
        %v2026 = vpop.f32.mrf.mxu0
        %v2027 = vadd.f32 %v1942, %v2026
        %v2028 = vpop.f32.mrf.mxu0
        %v2029 = vadd.f32 %v1944, %v2028
        %v2030 = vpop.f32.mrf.mxu0
        %v2031 = vadd.f32 %v1946, %v2030
        %2032 = vmatprep.mubr.bf16.mxu0 0
        %2033 = vmatmul.mubr.bf16.gmra.mxu0 %v1413
        %v2034 = vpop.f32.mrf.mxu0
        %v2035 = vadd.f32 %v1950, %v2034
        %v2036 = vpop.f32.mrf.mxu0
        %v2037 = vadd.f32 %v1952, %v2036
        %v2038 = vpop.f32.mrf.mxu0
        %v2039 = vadd.f32 %v1954, %v2038
        %v2040 = vpop.f32.mrf.mxu0
        %v2041 = vadd.f32 %v1956, %v2040
        %2042 = vmatprep.mubr.bf16.mxu0 0
        %2043 = vmatmul.mubr.bf16.gmra.mxu0 %v1414
        %v2044 = vpop.f32.mrf.mxu0
        %v2045 = vadd.f32 %v1960, %v2044
        %v2046 = vpop.f32.mrf.mxu0
        %v2047 = vadd.f32 %v1962, %v2046
        %v2048 = vpop.f32.mrf.mxu0
        %v2049 = vadd.f32 %v1964, %v2048
        %v2050 = vpop.f32.mrf.mxu0
        %v2051 = vadd.f32 %v1966, %v2050
        %2052 = vmatprep.mubr.bf16.mxu0 0
        %2053 = vmatmul.mubr.bf16.gmra.mxu0 %v1415
        %v2054 = vpop.f32.mrf.mxu0
        %v2055 = vpop.f32.mrf.mxu0
        %v2056 = vadd.f32 %v1971, %v2055
        %v2057 = vpop.f32.mrf.mxu0
        %v2058 = vpop.f32.mrf.mxu0
        %v2059 = vadd.f32 %v1974, %v2058
        %2060 = vmatprep.mubr.bf16.mxu0 0
        %2061 = vmatmul.mubr.bf16.gmra.mxu0 %v1416
        %v2062 = vpop.f32.mrf.mxu0
        %v2063 = vpop.f32.mrf.mxu0
        %v2064 = vpop.f32.mrf.mxu0
        %v2065 = vpop.f32.mrf.mxu0
        %2066 = vdwg.mxu0
        %2067 = vmatprep.subr.bf16.mxu0 0
        %2068 = vmatpush1.bf16.msra.mxu0 %v1776
        %2069 = vmatprep.subr.bf16.mxu0 0
        %2070 = vmatpush1.bf16.msra.mxu0 %v1773
        %2071 = vmatprep.subr.bf16.mxu0 0
        %2072 = vmatpush1.bf16.msra.mxu0 %v1770
        %2073 = vmatprep.subr.bf16.mxu0 0
        %2074 = vmatpush1.bf16.msra.mxu0 %v1767
        %2075 = vmatprep.subr.bf16.mxu0 0
        %2076 = vmatpush1.bf16.msra.mxu0 %v1764
        %2077 = vmatprep.subr.bf16.mxu0 0
        %2078 = vmatpush1.bf16.msra.mxu0 %v1761
        %2079 = vmatprep.subr.bf16.mxu0 0
        %2080 = vmatpush1.bf16.msra.mxu0 %v1758
        %2081 = vmatprep.subr.bf16.mxu0 0
        %2082 = vmatpush1.bf16.msra.mxu0 %v1755
        %2083 = vmatprep.subr.bf16.mxu0 0
        %2084 = vmatpush2.bf16.msra.mxu0 %v1800
        %2085 = vmatprep.subr.bf16.mxu0 0
        %2086 = vmatpush2.bf16.msra.mxu0 %v1797
        %2087 = vmatprep.subr.bf16.mxu0 0
        %2088 = vmatpush2.bf16.msra.mxu0 %v1794
        %2089 = vmatprep.subr.bf16.mxu0 0
        %2090 = vmatpush2.bf16.msra.mxu0 %v1791
        %2091 = vmatprep.subr.bf16.mxu0 0
        %2092 = vmatpush2.bf16.msra.mxu0 %v1788
        %2093 = vmatprep.subr.bf16.mxu0 0
        %2094 = vmatpush2.bf16.msra.mxu0 %v1785
        %2095 = vmatprep.subr.bf16.mxu0 0
        %2096 = vmatpush2.bf16.msra.mxu0 %v1782
        %2097 = vmatprep.subr.bf16.mxu0 0
        %2098 = vmatpush2.bf16.msra.mxu0 %v1779
        %2099 = vmatprep.mubr.bf16.mxu0 %v1315
        %2100 = vmatmul.mubr.bf16.gmra.mxu0 %v1378
        %v2101 = vpop.f32.mrf.mxu0
        %v2102 = vpop.f32.mrf.mxu0
        %v2103 = vpop.f32.mrf.mxu0
        %v2104 = vpop.f32.mrf.mxu0
        %2105 = vmatprep.mubr.bf16.mxu0 %v1316
        %2106 = vmatmul.mubr.bf16.gmra.mxu0 %v1379
        %v2107 = vpop.f32.mrf.mxu0
        %v2108 = vpop.f32.mrf.mxu0
        %v2109 = vpop.f32.mrf.mxu0
        %v2110 = vpop.f32.mrf.mxu0
        %2111 = vmatprep.mubr.bf16.mxu0 %v1317
        %2112 = vmatmul.mubr.bf16.gmra.mxu0 %v1380
        %v2113 = vpop.f32.mrf.mxu0
        %v2114 = vadd.f32 0.0, %v2113
        %v2115 = vpop.f32.mrf.mxu0
        %v2116 = vpop.f32.mrf.mxu0
        %v2117 = vadd.f32 0.0, %v2116
        %v2118 = vpop.f32.mrf.mxu0
        %2119 = vmatprep.mubr.bf16.mxu0 %v1318
        %2120 = vmatmul.mubr.bf16.gmra.mxu0 %v1381
        %v2121 = vpop.f32.mrf.mxu0
        %v2122 = vadd.f32 0.0, %v2121
        %v2123 = vpop.f32.mrf.mxu0
        %v2124 = vpop.f32.mrf.mxu0
        %v2125 = vadd.f32 0.0, %v2124
        %v2126 = vpop.f32.mrf.mxu0
        %2127 = vmatprep.mubr.bf16.mxu0 %v1319
        %2128 = vmatmul.mubr.bf16.gmra.mxu0 %v1382
        %v2129 = vpop.f32.mrf.mxu0
        %v2130 = vadd.f32 0.0, %v2129
        %v2131 = vpop.f32.mrf.mxu0
        %v2132 = vpop.f32.mrf.mxu0
        %v2133 = vadd.f32 0.0, %v2132
        %v2134 = vpop.f32.mrf.mxu0
        %2135 = vmatprep.mubr.bf16.mxu0 %v1320
        %2136 = vmatmul.mubr.bf16.gmra.mxu0 %v1383
        %v2137 = vpop.f32.mrf.mxu0
        %v2138 = vadd.f32 0.0, %v2137
        %v2139 = vpop.f32.mrf.mxu0
        %v2140 = vpop.f32.mrf.mxu0
        %v2141 = vadd.f32 0.0, %v2140
        %v2142 = vpop.f32.mrf.mxu0
        %2143 = vdwg.mxu0
        %2144 = vmatprep.subr.bf16.mxu0 0
        %2145 = vmatpush1.bf16.msra.mxu0 %v1824
        %2146 = vmatprep.subr.bf16.mxu0 0
        %2147 = vmatpush1.bf16.msra.mxu0 %v1821
        %2148 = vmatprep.subr.bf16.mxu0 0
        %2149 = vmatpush1.bf16.msra.mxu0 %v1818
        %2150 = vmatprep.subr.bf16.mxu0 0
        %2151 = vmatpush1.bf16.msra.mxu0 %v1815
        %2152 = vmatprep.subr.bf16.mxu0 0
        %2153 = vmatpush1.bf16.msra.mxu0 %v1812
        %2154 = vmatprep.subr.bf16.mxu0 0
        %2155 = vmatpush1.bf16.msra.mxu0 %v1809
        %2156 = vmatprep.subr.bf16.mxu0 0
        %2157 = vmatpush1.bf16.msra.mxu0 %v1806
        %2158 = vmatprep.subr.bf16.mxu0 0
        %2159 = vmatpush1.bf16.msra.mxu0 %v1803
        %2160 = vmatprep.subr.bf16.mxu0 0
        %2161 = vmatpush2.bf16.msra.mxu0 0
        %2162 = vmatprep.subr.bf16.mxu0 0
        %2163 = vmatpush2.bf16.msra.mxu0 0
        %2164 = vmatprep.subr.bf16.mxu0 0
        %2165 = vmatpush2.bf16.msra.mxu0 0
        %2166 = vmatprep.subr.bf16.mxu0 0
        %2167 = vmatpush2.bf16.msra.mxu0 0
        %2168 = vmatprep.subr.bf16.mxu0 0
        %2169 = vmatpush2.bf16.msra.mxu0 0
        %2170 = vmatprep.subr.bf16.mxu0 0
        %2171 = vmatpush2.bf16.msra.mxu0 0
        %2172 = vmatprep.subr.bf16.mxu0 0
        %2173 = vmatpush2.bf16.msra.mxu0 0
        %2174 = vmatprep.subr.bf16.mxu0 0
        %2175 = vmatpush2.bf16.msra.mxu0 0
        %2176 = vmatprep.mubr.bf16.mxu0 0
        %2177 = vmatmul.mubr.bf16.gmra.mxu0 %v1411
        %v2178 = vpop.f32.mrf.mxu0
        %v2179 = vpop.f32.mrf.mxu0
        %v2180 = vpop.f32.mrf.mxu0
        %v2181 = vpop.f32.mrf.mxu0
        %2182 = vmatprep.mubr.bf16.mxu0 0
        %2183 = vmatmul.mubr.bf16.gmra.mxu0 %v1412
        %v2184 = vpop.f32.mrf.mxu0
        %v2185 = vpop.f32.mrf.mxu0
        %v2186 = vpop.f32.mrf.mxu0
        %v2187 = vpop.f32.mrf.mxu0
        %2188 = vmatprep.mubr.bf16.mxu0 0
        %2189 = vmatmul.mubr.bf16.gmra.mxu0 %v1413
        %v2190 = vpop.f32.mrf.mxu0
        %v2191 = vadd.f32 %v2114, %v2190
        %v2192 = vpop.f32.mrf.mxu0
        %v2193 = vpop.f32.mrf.mxu0
        %v2194 = vadd.f32 %v2117, %v2193
        %v2195 = vpop.f32.mrf.mxu0
        %2196 = vmatprep.mubr.bf16.mxu0 0
        %2197 = vmatmul.mubr.bf16.gmra.mxu0 %v1414
        %v2198 = vpop.f32.mrf.mxu0
        %v2199 = vadd.f32 %v2122, %v2198
        %v2200 = vpop.f32.mrf.mxu0
        %v2201 = vpop.f32.mrf.mxu0
        %v2202 = vadd.f32 %v2125, %v2201
        %v2203 = vpop.f32.mrf.mxu0
        %2204 = vmatprep.mubr.bf16.mxu0 0
        %2205 = vmatmul.mubr.bf16.gmra.mxu0 %v1415
        %v2206 = vpop.f32.mrf.mxu0
        %v2207 = vadd.f32 %v2130, %v2206
        %v2208 = vpop.f32.mrf.mxu0
        %v2209 = vpop.f32.mrf.mxu0
        %v2210 = vadd.f32 %v2133, %v2209
        %v2211 = vpop.f32.mrf.mxu0
        %2212 = vmatprep.mubr.bf16.mxu0 0
        %2213 = vmatmul.mubr.bf16.gmra.mxu0 %v1416
        %v2214 = vpop.f32.mrf.mxu0
        %v2215 = vadd.f32 %v2138, %v2214
        %v2216 = vpop.f32.mrf.mxu0
        %v2217 = vpop.f32.mrf.mxu0
        %v2218 = vadd.f32 %v2141, %v2217
        %v2219 = vpop.f32.mrf.mxu0
        %2220 = vdwg.mxu0
        %v2221 = vadd.f32 %v2017, %v2027
        %v2222 = vadd.f32 %v2020, %v2031
        %v2223 = vadd.f32 %v2025, %v2037
        %v2224 = vadd.f32 %v2029, %v2041
        %v2225 = vadd.f32 %v2035, %v2047
        %v2226 = vadd.f32 %v2039, %v2051
        %v2227 = vadd.f32 %v2045, %v2056
        %v2228 = vadd.f32 %v2049, %v2059
        %v2229 = vadd.f32 %v2221, %v2191
        %v2230 = vadd.f32 %v2222, %v2194
        %v2231 = vadd.f32 %v2223, %v2199
        %v2232 = vadd.f32 %v2224, %v2202
        %v2233 = vadd.f32 %v2225, %v2207
        %v2234 = vadd.f32 %v2226, %v2210
        %v2235 = vadd.f32 %v2227, %v2215
        %v2236 = vadd.f32 %v2228, %v2218
        %v2237 = vld [vmem:[#allocation3] sm:$0x1]
        %v2238 = vadd.f32 %v2229, %v2230
        %v2239 = vadd.f32 %v2238, %v2231
        %v2240 = vadd.f32 %v2239, %v2232
        %v2241 = vadd.f32 %v2240, %v2233
        %v2242 = vadd.f32 %v2241, %v2234
        %v2243 = vadd.f32 %v2242, %v2235
        %v2244 = vadd.f32 %v2243, %v2236
        %v2245 = vrot.slane %v2244, 4
        %v2246 = vadd.f32 %v2244, %v2245
        %v2247 = vrot.slane %v2246, 2
        %v2248 = vadd.f32 %v2246, %v2247
        %v2249 = vrot.slane %v2248, 1
        %v2250 = vadd.f32 %v2248, %v2249
        %v2251 = vadd.f32 %v2237, %v2250
        %2252 = vst [vmem:[#allocation3] sm:$0x1] %v2251
        %v2253 = vld [vmem:[#allocation4] sm:$0x1]
        %v2254 = vmul.f32 %v2229, %v2229
        %v2255 = vmul.f32 %v2230, %v2230
        %v2256 = vmul.f32 %v2231, %v2231
        %v2257 = vmul.f32 %v2232, %v2232
        %v2258 = vmul.f32 %v2233, %v2233
        %v2259 = vmul.f32 %v2234, %v2234
        %v2260 = vmul.f32 %v2235, %v2235
        %v2261 = vmul.f32 %v2236, %v2236
        %v2262 = vadd.f32 %v2254, %v2255
        %v2263 = vadd.f32 %v2262, %v2256
        %v2264 = vadd.f32 %v2263, %v2257
        %v2265 = vadd.f32 %v2264, %v2258
        %v2266 = vadd.f32 %v2265, %v2259
        %v2267 = vadd.f32 %v2266, %v2260
        %v2268 = vadd.f32 %v2267, %v2261
        %v2269 = vrot.slane %v2268, 4
        %v2270 = vadd.f32 %v2268, %v2269
        %v2271 = vrot.slane %v2270, 2
        %v2272 = vadd.f32 %v2270, %v2271
        %v2273 = vrot.slane %v2272, 1
        %v2274 = vadd.f32 %v2272, %v2273
        %v2275 = vadd.f32 %v2253, %v2274
        %2276 = vst [vmem:[#allocation4] sm:$0x1] %v2275
        %s2277 = smul.u32 %s1227, 16
        %s2278 = scalar_lea.vmem %s170, %s2277
        %2279 = vst [vmem:[%s2278] sm:$0xff] %v2229
        %2280 = vst [vmem:[%s2278 + $0x8] sm:$0xff] %v2230
        %2281 = vst [vmem:[%s2278 + $0x10] sm:$0xff] %v2231
        %2282 = vst [vmem:[%s2278 + $0x18] sm:$0xff] %v2232
        %2283 = vst [vmem:[%s2278 + $0x20] sm:$0xff] %v2233
        %2284 = vst [vmem:[%s2278 + $0x28] sm:$0xff] %v2234
        %2285 = vst [vmem:[%s2278 + $0x30] sm:$0xff] %v2235
        %2286 = vst [vmem:[%s2278 + $0x38] sm:$0xff] %v2236
      $region44: #{residual_block.1} parent=31 // loop_footer
        %s1226 = sadd.s32 1, %s1222
      $region45: #{residual_block.1} parent=31 // loop_footer_branch
        %1221 = sbr.rel target = $region41
      $region46: #{residual_block.1} parent=31 // loop_exit
        _
      %v2287 = vld [vmem:[#allocation3] sm:$0x1]
      %v2288 = vmul.f32 %v2287, 0.00390625
      %v2289 = vld [vmem:[#allocation4] sm:$0x1]
      %v2290 = vmul.f32 %v2289, 0.00390625
      %v2291 = vmul.f32 %v2288, %v2288
      %v2292 = vsub.f32 %v2290, %v2291
      %v2293 = vmax.f32 %v2292, 0.0
      %v2294 = vadd.f32 %v2293, 1e-05
      %v2295 = vrsqrt.pop %v2294
      loop: start=0, step=1, limit=4
      $region47: #{residual_block.1} parent=31 // loop_pre_header
        _
      $region48: #{residual_block.1} parent=31 // loop_header
        %s2297 = sphi 0, %s2301
        %p2298 = scmp.ge.s32.totalorder %s2297, 4
      $region49: #{residual_block.1} parent=31 // loop_header_branch
        %2300 = sbr.rel (%p2298) target = $region53
      $region50: #{residual_block.1} parent=31 // loop_body
        %s2302 = smul.u32 %s2297, 4
        %s2303 = smul.u32 %s2302, 16
        %s2304 = scalar_lea.vmem %s170, %s2303
        %v2305 = vld [vmem:[%s2304] sm:$0xff]
        %v2306 = vld [vmem:[%s2304 + $0x8] sm:$0xff]
        %v2307 = vld [vmem:[%s2304 + $0x10] sm:$0xff]
        %v2308 = vld [vmem:[%s2304 + $0x18] sm:$0xff]
        %v2309 = vld [vmem:[%s2304 + $0x20] sm:$0xff]
        %v2310 = vld [vmem:[%s2304 + $0x28] sm:$0xff]
        %v2311 = vld [vmem:[%s2304 + $0x30] sm:$0xff]
        %v2312 = vld [vmem:[%s2304 + $0x38] sm:$0xff]
        %v2314 = vlaneseq
        %v2315 = vshrl.u32 %v2314, 7
        %v2316 = vsub.s32 0, %v2315
        %v2317 = vrot.slane %v2288, %v2316
        %v2319 = vsub.f32 %v2305, %v2317
        %v2320 = vsub.f32 %v2306, %v2317
        %v2321 = vsub.f32 %v2307, %v2317
        %v2322 = vsub.f32 %v2308, %v2317
        %v2323 = vsub.f32 %v2309, %v2317
        %v2324 = vsub.f32 %v2310, %v2317
        %v2325 = vsub.f32 %v2311, %v2317
        %v2326 = vsub.f32 %v2312, %v2317
        %v2328 = vlaneseq
        %v2329 = vshrl.u32 %v2328, 7
        %v2330 = vsub.s32 0, %v2329
        %v2331 = vrot.slane %v2295, %v2330
        %v2333 = vmul.f32 %v2319, %v2331
        %v2334 = vmul.f32 %v2320, %v2331
        %v2335 = vmul.f32 %v2321, %v2331
        %v2336 = vmul.f32 %v2322, %v2331
        %v2337 = vmul.f32 %v2323, %v2331
        %v2338 = vmul.f32 %v2324, %v2331
        %v2339 = vmul.f32 %v2325, %v2331
        %v2340 = vmul.f32 %v2326, %v2331
        %s2341 = scalar_lea.vmem %s165, %s2303
        %v2342 = vld [vmem:[%s2341] sm:$0xff]
        %v2343 = vld [vmem:[%s2341 + $0x8] sm:$0xff]
        %v2344 = vld [vmem:[%s2341 + $0x10] sm:$0xff]
        %v2345 = vld [vmem:[%s2341 + $0x18] sm:$0xff]
        %v2346 = vld [vmem:[%s2341 + $0x20] sm:$0xff]
        %v2347 = vld [vmem:[%s2341 + $0x28] sm:$0xff]
        %v2348 = vld [vmem:[%s2341 + $0x30] sm:$0xff]
        %v2349 = vld [vmem:[%s2341 + $0x38] sm:$0xff]
        %v2350 = vadd.f32 %v2333, %v2342
        %v2351 = vadd.f32 %v2334, %v2343
        %v2352 = vadd.f32 %v2335, %v2344
        %v2353 = vadd.f32 %v2336, %v2345
        %v2354 = vadd.f32 %v2337, %v2346
        %v2355 = vadd.f32 %v2338, %v2347
        %v2356 = vadd.f32 %v2339, %v2348
        %v2357 = vadd.f32 %v2340, %v2349
        %2358 = vst [vmem:[%s2304] sm:$0xff] %v2350
        %2359 = vst [vmem:[%s2304 + $0x8] sm:$0xff] %v2351
        %2360 = vst [vmem:[%s2304 + $0x10] sm:$0xff] %v2352
        %2361 = vst [vmem:[%s2304 + $0x18] sm:$0xff] %v2353
        %2362 = vst [vmem:[%s2304 + $0x20] sm:$0xff] %v2354
        %2363 = vst [vmem:[%s2304 + $0x28] sm:$0xff] %v2355
        %2364 = vst [vmem:[%s2304 + $0x30] sm:$0xff] %v2356
        %2365 = vst [vmem:[%s2304 + $0x38] sm:$0xff] %v2357
      $region51: #{residual_block.1} parent=31 // loop_footer
        %s2301 = sadd.s32 1, %s2297
      $region52: #{residual_block.1} parent=31 // loop_footer_branch
        %2296 = sbr.rel target = $region48
      $region53: #{residual_block.1} parent=31 // loop_exit
        _
      %p2366 = scmp.lt.s32.totalorder %s14, 1
      %s2367 = scalar_select %p2366, %s14, 1
      %s2368 = smul.addr %s2367, 32
      %s2369 = smul.addr %s2368, 8
      %s2370 = scalar_lea.vmem %s3, %s2369
      // Predicated region
      $region54: #{residual_block.1} parent=31 // pred_check
        %p2371 = pneg %p100
      $region55: #{residual_block.1} parent=31 // pred_check_branch
        %2373 = sbr.rel (%p2371) target = $region57
      $region56: #{residual_block.1} parent=31 // pred_region
        _
      $region57: #{residual_block.1} parent=31 // pred_fallthru
        _
    $region32: #{residual_block.1} parent=5 // pred_fallthru
      _
    %p2374 = scmp.le.s32.totalorder 2, %s9
    // Predicated region
    $region58: #{residual_block.1} parent=5 // pred_check
      %p2375 = pneg %p2374
    $region59: #{residual_block.1} parent=5 // pred_check_branch
      %2377 = sbr.rel (%p2375) target = $region61
    $region60: #{residual_block.1} parent=5 // pred_region
      %s2378 = ssub.s32 %s9, 2
      // Predicated region
      $region62: #{residual_block.1} parent=60 // pred_check
        %p2379 = pneg %p106
      $region63: #{residual_block.1} parent=60 // pred_check_branch
        %2381 = sbr.rel (%p2379) target = $region65
      $region64: #{residual_block.1} parent=60 // pred_region
        %p2382 = scmp.lt.s32.totalorder %s15, 1
        %s2383 = scalar_select %p2382, %s15, 1
        %s2384 = smul.addr %s2383, 32
        %s2385 = smul.addr %s2384, 8
        %s2386 = scalar_lea.vmem %s3, %s2385
      $region65: #{residual_block.1} parent=60 // pred_fallthru
        _
    $region61: #{residual_block.1} parent=5 // pred_fallthru
      _
  $region6: #{residual_block.1} parent=0 // loop_footer
    %s13 = sadd.s32 1, %s9
  $region7: #{residual_block.1} parent=0 // loop_footer_branch
    %8 = sbr.rel target = $region3
  $region8: #{residual_block.1} parent=0 // loop_exit
    _

</llo_original>
